<compile_context>
chip_gen: v5e
topology: v5e:2x2
jax: 0.10.0
libtpu: 0.0.40
codegen_flags: <defaults>
</compile_context>

<pallas_src>
import functools

import jax
import jax.numpy as jnp
from jax.experimental import pallas as pl
from jax.experimental.pallas import tpu as pltpu


def _matchnet_kernel(q_ref, s_ref, st_ref, w_ref, bias_ref, out_ref, *,
                     input_dim, gate_pad, process_step):
    """One grid step == one few-shot episode ([B,d] queries vs [S,d] support)."""
    d = input_dim
    Hp = gate_pad                        # per-gate lane width, padded to 128*k

    q = q_ref[0]                         # [B, d]    f32
    s_bf = s_ref[0]                      # [S, d]    bf16
    st_bf = st_ref[0]                    # [d, S]    bf16 (support_mean.T)
    wih = w_ref[0:d, :]                  # [d, 4Hp]  bf16 (W_ih^T, gate-padded)
    whh = w_ref[d:3 * d, :]              # [2d, 4Hp] bf16 (W_hh^T, gate-padded)
    bias = bias_ref[...]                 # [1, 4Hp]  f32  (b_ih + b_hh, padded)

    B = q.shape[0]
    q_bf = q.astype(jnp.bfloat16)

    # Loop-invariant input contribution to the LSTM gates (hoisted).
    gates_x = jnp.dot(q_bf, wih, preferred_element_type=jnp.float32) + bias

    # Carried cell state stays f32 (v5e-safe).  Padded gate lanes of `c` stay
    # exactly 0 because padded weight columns AND bias are 0 (asserted at init)
    # and h is only ever read back through [:, :d].
    c = jnp.zeros((B, Hp), jnp.float32)
    h_r_bf = None                        # [B, 2d] bf16 recurrent input (step>0)

    # process_step is small & static -> fully unrolled inside the kernel.
    for step in range(process_step):
        gates = gates_x
        if step > 0:
            # Single merged recurrent matmul: [h | r] @ W_hh^T.
            gates = gates + jnp.dot(h_r_bf, whh,
                                    preferred_element_type=jnp.float32)

        # Lane-aligned gate slices (each gate padded to Hp = 128*k columns).
        i_g = jax.nn.sigmoid(gates[:, 0 * Hp:1 * Hp])
        f_g = jax.nn.sigmoid(gates[:, 1 * Hp:2 * Hp])
        g_g = jnp.tanh(gates[:, 2 * Hp:3 * Hp])
        o_g = jax.nn.sigmoid(gates[:, 3 * Hp:4 * Hp])
        c = f_g * c + i_g * g_g
        h_lstm = o_g * jnp.tanh(c)                     # [B, Hp]

        h = q + h_lstm[:, :d]                          # [B, d], f32
        h_bf = h.astype(jnp.bfloat16)
        logits = jnp.dot(h_bf, st_bf, preferred_element_type=jnp.float32)

        if step == process_step - 1:
            # Final matching scores == last iteration's logits (skip dead work).
            out_ref[0] = logits
        else:
            # Softmax over the support axis.  Exact divide: denom is only
            # [B,1] and an approx reciprocal would compound through the
            # recurrence (review correctness concern).
            m = jnp.max(logits, axis=1, keepdims=True)
            e = jnp.exp(logits - m)
            attn = e / jnp.sum(e, axis=1, keepdims=True)
            r = jnp.dot(attn.astype(jnp.bfloat16), s_bf,
                        preferred_element_type=jnp.float32)       # [B, d]
            # Lane-concat for next step's single recurrent matmul.
            h_r_bf = jnp.concatenate([h, r], axis=1).astype(jnp.bfloat16)


def _pad_gates(w, H, Hp):
    """Pad each of the 4 gate blocks along the last axis from H to Hp columns."""
    if Hp == H:
        return w
    blocks = [w[..., k * H:(k + 1) * H] for k in range(4)]
    pad = [(0, 0)] * (w.ndim - 1) + [(0, Hp - H)]
    return jnp.concatenate([jnp.pad(b, pad) for b in blocks], axis=-1)


@functools.partial(jax.jit, static_argnames=("gate_pad", "process_step"))
def _matchnet_batched(w_slab, bias_p, support_mean, query_mean, *,
                      gate_pad, process_step):
    """support_mean: [T,S,d] f32, query_mean: [T,B,d] f32 -> scores [T,B,S] f32."""
    T, B, d = query_mean.shape
    S = support_mean.shape[1]
    Hp = gate_pad

    q = query_mean.astype(jnp.float32)
    s_bf = support_mean.astype(jnp.bfloat16)                           # [T,S,d]
    st_bf = jnp.swapaxes(support_mean, 1, 2).astype(jnp.bfloat16)      # [T,d,S]

    kernel = functools.partial(_matchnet_kernel, input_dim=d,
                               gate_pad=Hp, process_step=process_step)

    # Advisory cost hint so XLA schedules the tiny custom call sensibly.
    flops = T * (2 * B * d * 4 * Hp
                 + (process_step - 1) * 2 * B * (2 * d) * 4 * Hp
                 + process_step * 2 * B * d * S
                 + (process_step - 1) * 2 * B * S * d)
    transcendentals = T * (process_step * 5 * B * Hp
                           + (process_step - 1) * B * S)
    bytes_accessed = (q.size * 4 + 2 * s_bf.size * 2 + w_slab.size * 2
                      + bias_p.size * 4 + T * B * S * 4)

    grid_spec = pltpu.PrefetchScalarGridSpec(
        num_scalar_prefetch=0,
        grid=(T,),
        in_specs=[
            pl.BlockSpec((1, B, d), lambda t: (t, 0, 0)),       # queries (per ep)
            pl.BlockSpec((1, S, d), lambda t: (t, 0, 0)),       # support (per ep)
            pl.BlockSpec((1, d, S), lambda t: (t, 0, 0)),       # support^T (per ep)
            pl.BlockSpec((3 * d, 4 * Hp), lambda t: (0, 0)),    # weight slab (resident)
            pl.BlockSpec((1, 4 * Hp), lambda t: (0, 0)),        # bias (resident)
        ],
        out_specs=pl.BlockSpec((1, B, S), lambda t: (t, 0, 0)),
    )

    return pl.pallas_call(
        kernel,
        out_shape=jax.ShapeDtypeStruct((T, B, S), jnp.float32),
        grid_spec=grid_spec,
        compiler_params=pltpu.CompilerParams(
            dimension_semantics=("parallel",)),   # episode axis -> v7x 2nd TC
        cost_estimate=pl.CostEstimate(flops=flops,
                                      transcendentals=transcendentals,
                                      bytes_accessed=bytes_accessed),
    )(q, s_bf, st_bf, w_slab, bias_p)


def make_matchnet(w_ih, w_hh, b_ih, b_hh, *, input_dim, process_step=4):
    """One-time weight prep (hoisted out of the per-call hot path).

    Returns forward(support_mean, support_var, query_mean, query_var) accepting
    either a single episode ([S,d]/[B,d], like the PyTorch module) or a batch
    of episodes ([T,S,d]/[T,B,d]).  support_var / query_var are unused, as in
    the reference module.
    """
    d = input_dim
    H = 2 * d
    Hp = ((H + 127) // 128) * 128               # lane-aligned per-gate width

    wih_t = jnp.asarray(w_ih, jnp.float32).T                         # [d, 4H]
    whh_t = jnp.asarray(w_hh, jnp.float32).T                         # [2d, 4H]
    bias = (jnp.asarray(b_ih, jnp.float32)
            + jnp.asarray(b_hh, jnp.float32)).reshape(1, 4 * H)

    w_slab = jnp.concatenate([_pad_gates(wih_t, H, Hp),
                              _pad_gates(whh_t, H, Hp)],
                             axis=0).astype(jnp.bfloat16)             # [3d, 4Hp]
    bias_p = _pad_gates(bias, H, Hp)                                  # [1, 4Hp] f32

    if Hp != H:
        # Guard (review): padded gate columns must be exactly zero in BOTH the
        # weight slab and the bias so padded cell-state lanes can never leak.
        for g in range(4):
            assert not bool(jnp.any(w_slab[:, g * Hp + H:(g + 1) * Hp] != 0))
            assert not bool(jnp.any(bias_p[:, g * Hp + H:(g + 1) * Hp] != 0))

    def forward(support_mean, support_var, query_mean, query_var):
        del support_var, query_var          # unused, as in the reference module
        single = query_mean.ndim == 2
        q3 = query_mean[None] if single else query_mean
        s3 = support_mean[None] if single else support_mean
        scores = _matchnet_batched(w_slab, bias_p,
                                   jnp.asarray(s3, jnp.float32),
                                   jnp.asarray(q3, jnp.float32),
                                   gate_pad=Hp, process_step=process_step)
        # torch .squeeze(): drop all size-1 dims (incl. the T=1 axis).
        return jnp.squeeze(scores)

    return forward


def _reference_single(support_mean, query_mean, w_ih, w_hh, b_ih, b_hh,
                      process_step):
    """Pure-JAX f32 reference of the PyTorch forward (one episode)."""
    d = query_mean.shape[1]
    H = 2 * d
    B = query_mean.shape[0]
    h_r = jnp.zeros((B, H), jnp.float32)
    c = jnp.zeros((B, H), jnp.float32)
    h = query_mean
    for _ in range(process_step):
        gates = query_mean @ w_ih.T + h_r @ w_hh.T + b_ih + b_hh
        i_g = jax.nn.sigmoid(gates[:, :H])
        f_g = jax.nn.sigmoid(gates[:, H:2 * H])
        g_g = jnp.tanh(gates[:, 2 * H:3 * H])
        o_g = jax.nn.sigmoid(gates[:, 3 * H:])
        c = f_g * c + i_g * g_g
        h_r_new = o_g * jnp.tanh(c)
        h = query_mean + h_r_new[:, :d]
        attn = jax.nn.softmax(h @ support_mean.T, axis=1)
        r = attn @ support_mean
        h_r = jnp.concatenate([h, r], axis=1)
    return h @ support_mean.T


if __name__ == "__main__":
    # Small shapes implied by the module: few-shot episodes, each with a
    # support set and a query batch.  T episodes share the LSTM weights and
    # run as one pallas_call with a grid over the episode axis.
    input_dim = 32           # entity-pair embedding dim
    process_step = 4
    T = 4                    # batch of episodes (grid axis)
    B = 8                    # queries per episode
    S = 8                    # support set size per episode
    H = 2 * input_dim

    key = jax.random.PRNGKey(0)
    ks = jax.random.split(key, 8)
    support_mean = jax.random.normal(ks[0], (T, S, input_dim), jnp.float32)
    support_var = jax.random.uniform(ks[1], (T, S, input_dim), jnp.float32)   # unused
    query_mean = jax.random.normal(ks[2], (T, B, input_dim), jnp.float32)
    query_var = jax.random.uniform(ks[3], (T, B, input_dim), jnp.float32)     # unused

    # Deterministic LSTMCell parameters (nn.LSTMCell(input_dim, 2*input_dim)).
    scale = 1.0 / jnp.sqrt(jnp.float32(H))
    w_ih = scale * jax.random.normal(ks[4], (4 * H, input_dim), jnp.float32)
    w_hh = scale * jax.random.normal(ks[5], (4 * H, H), jnp.float32)
    b_ih = scale * jax.random.normal(ks[6], (4 * H,), jnp.float32)
    b_hh = scale * jax.random.normal(ks[7], (4 * H,), jnp.float32)

    matchnet = make_matchnet(w_ih, w_hh, b_ih, b_hh,
                             input_dim=input_dim, process_step=process_step)

    out = matchnet(support_mean, support_var, query_mean, query_var)
    out = jax.block_until_ready(out)
    assert out.shape == (T, B, S), out.shape

    ref = jax.vmap(lambda s, q: _reference_single(
        s, q, w_ih, w_hh, b_ih, b_hh, process_step))(support_mean, query_mean)
    max_err = float(jnp.max(jnp.abs(out - ref)))
    # bf16 MXU operands (f32 accumulation) through 4 recurrence steps.
    assert jnp.allclose(out, ref, atol=1e-1, rtol=5e-2), max_err

    # Original single-episode interface ([S,d]/[B,d]), as in the PyTorch module.
    out1 = matchnet(support_mean[0], support_var[0], query_mean[0], query_var[0])
    out1 = jax.block_until_ready(out1)
    assert out1.shape == (B, S), out1.shape
    assert jnp.allclose(out1, ref[0], atol=1e-1, rtol=5e-2)

    print("KERNEL_OK")
</pallas_src>

<mosaic_0001>
module attributes {stable_mosaic.version = 11 : i64} {
  func.func @_matchnet_kernel(%arg0: i32, %arg1: memref<1x8x32xf32, #tpu.memory_space<vmem>>, %arg2: memref<1x8x32xbf16, #tpu.memory_space<vmem>>, %arg3: memref<1x32x8xbf16, #tpu.memory_space<vmem>>, %arg4: memref<96x512xbf16, #tpu.memory_space<vmem>>, %arg5: memref<1x512xf32, #tpu.memory_space<vmem>>, %arg6: memref<1x8x8xf32, #tpu.memory_space<vmem>>) attributes {dimension_semantics = [#tpu.dimension_semantics<parallel>], iteration_bounds = array<i64: 4>, scalar_prefetch = 0 : i64, scratch_operands = 0 : i64, tpu.core_type = #tpu.core_type<tc>, window_params = [{transform_indices = @transform_0, window_bounds = array<i64: 1, 8, 32>}, {transform_indices = @transform_1, window_bounds = array<i64: 1, 8, 32>}, {transform_indices = @transform_2, window_bounds = array<i64: 1, 32, 8>}, {pipeline_mode = #tpu.pipeline_mode<synchronous>, transform_indices = @transform_3, window_bounds = array<i64: 96, 512>}, {pipeline_mode = #tpu.pipeline_mode<synchronous>, transform_indices = @transform_4, window_bounds = array<i64: 1, 512>}, {transform_indices = @transform_5, window_bounds = array<i64: 1, 8, 8>}]} {
    %c0 = arith.constant 0 : index
    %c0_0 = arith.constant 0 : index
    %c0_1 = arith.constant 0 : index
    %0 = vector.load %arg1[%c0, %c0_0, %c0_1] : memref<1x8x32xf32, #tpu.memory_space<vmem>>, vector<1x8x32xf32>
    %1 = vector.shape_cast %0 : vector<1x8x32xf32> to vector<8x32xf32>
    %c0_2 = arith.constant 0 : index
    %c0_3 = arith.constant 0 : index
    %c0_4 = arith.constant 0 : index
    %2 = vector.load %arg2[%c0_2, %c0_3, %c0_4] : memref<1x8x32xbf16, #tpu.memory_space<vmem>>, vector<1x8x32xbf16>
    %3 = vector.shape_cast %2 : vector<1x8x32xbf16> to vector<8x32xbf16>
    %c0_5 = arith.constant 0 : index
    %c0_6 = arith.constant 0 : index
    %c0_7 = arith.constant 0 : index
    %4 = vector.load %arg3[%c0_5, %c0_6, %c0_7] : memref<1x32x8xbf16, #tpu.memory_space<vmem>>, vector<1x32x8xbf16>
    %5 = vector.shape_cast %4 : vector<1x32x8xbf16> to vector<32x8xbf16>
    %c0_8 = arith.constant 0 : index
    %c0_9 = arith.constant 0 : index
    %6 = vector.load %arg4[%c0_8, %c0_9] : memref<96x512xbf16, #tpu.memory_space<vmem>>, vector<32x512xbf16>
    %c32 = arith.constant 32 : index
    %c0_10 = arith.constant 0 : index
    %7 = vector.load %arg4[%c32, %c0_10] : memref<96x512xbf16, #tpu.memory_space<vmem>>, vector<64x512xbf16>
    %c0_11 = arith.constant 0 : index
    %c0_12 = arith.constant 0 : index
    %8 = vector.load %arg5[%c0_11, %c0_12] : memref<1x512xf32, #tpu.memory_space<vmem>>, vector<1x512xf32>
    %9 = arith.truncf %1 : vector<8x32xf32> to vector<8x32xbf16>
    %cst = arith.constant dense<0.000000e+00> : vector<8x512xf32>
    %10 = tpu.matmul %9, %6, %cst {dimension_numbers = #tpu.dot_dimension_numbers<[1], [0], [0], [1], [0, 0, 1, 1], [], []>} : vector<8x32xbf16>, vector<32x512xbf16>, vector<8x512xf32> -> vector<8x512xf32>
    %11 = vector.broadcast %8 : vector<1x512xf32> to vector<8x512xf32>
    %12 = arith.addf %10, %11 : vector<8x512xf32>
    %cst_13 = arith.constant 0.000000e+00 : f32
    %13 = vector.broadcast %cst_13 : f32 to vector<8x128xf32>
    %14 = vector.extract_strided_slice %12 {offsets = [0, 0], sizes = [8, 128], strides = [1, 1]} : vector<8x512xf32> to vector<8x128xf32>
    %15 = arith.negf %14 : vector<8x128xf32>
    %16 = math.exp %15 : vector<8x128xf32>
    %cst_14 = arith.constant 1.000000e+00 : f32
    %17 = vector.broadcast %cst_14 : f32 to vector<8x128xf32>
    %18 = arith.addf %17, %16 : vector<8x128xf32>
    %19 = arith.divf %17, %18 : vector<8x128xf32>
    %20 = vector.extract_strided_slice %12 {offsets = [0, 128], sizes = [8, 128], strides = [1, 1]} : vector<8x512xf32> to vector<8x128xf32>
    %21 = arith.negf %20 : vector<8x128xf32>
    %22 = math.exp %21 : vector<8x128xf32>
    %cst_15 = arith.constant 1.000000e+00 : f32
    %23 = vector.broadcast %cst_15 : f32 to vector<8x128xf32>
    %24 = arith.addf %23, %22 : vector<8x128xf32>
    %25 = arith.divf %23, %24 : vector<8x128xf32>
    %26 = vector.extract_strided_slice %12 {offsets = [0, 256], sizes = [8, 128], strides = [1, 1]} : vector<8x512xf32> to vector<8x128xf32>
    %27 = math.tanh %26 : vector<8x128xf32>
    %28 = vector.extract_strided_slice %12 {offsets = [0, 384], sizes = [8, 128], strides = [1, 1]} : vector<8x512xf32> to vector<8x128xf32>
    %29 = arith.negf %28 : vector<8x128xf32>
    %30 = math.exp %29 : vector<8x128xf32>
    %cst_16 = arith.constant 1.000000e+00 : f32
    %31 = vector.broadcast %cst_16 : f32 to vector<8x128xf32>
    %32 = arith.addf %31, %30 : vector<8x128xf32>
    %33 = arith.divf %31, %32 : vector<8x128xf32>
    %34 = arith.mulf %25, %13 : vector<8x128xf32>
    %35 = arith.mulf %19, %27 : vector<8x128xf32>
    %36 = arith.addf %34, %35 : vector<8x128xf32>
    %37 = math.tanh %36 : vector<8x128xf32>
    %38 = arith.mulf %33, %37 : vector<8x128xf32>
    %39 = vector.extract_strided_slice %38 {offsets = [0, 0], sizes = [8, 32], strides = [1, 1]} : vector<8x128xf32> to vector<8x32xf32>
    %40 = arith.addf %1, %39 : vector<8x32xf32>
    %41 = arith.truncf %40 : vector<8x32xf32> to vector<8x32xbf16>
    %cst_17 = arith.constant dense<0.000000e+00> : vector<8x8xf32>
    %42 = tpu.matmul %41, %5, %cst_17 {dimension_numbers = #tpu.dot_dimension_numbers<[1], [0], [0], [1], [0, 0, 1, 1], [], []>} : vector<8x32xbf16>, vector<32x8xbf16>, vector<8x8xf32> -> vector<8x8xf32>
    %cst_18 = arith.constant dense<0xFF800000> : vector<8xf32>
    %43 = vector.multi_reduction <maximumf>, %42, %cst_18 [1] : vector<8x8xf32> to vector<8xf32>
    %44 = vector.shape_cast %43 : vector<8xf32> to vector<8x1xf32>
    %45 = vector.broadcast %44 : vector<8x1xf32> to vector<8x8xf32>
    %46 = arith.subf %42, %45 : vector<8x8xf32>
    %47 = math.exp %46 : vector<8x8xf32>
    %cst_19 = arith.constant dense<0.000000e+00> : vector<8xf32>
    %48 = vector.multi_reduction <add>, %47, %cst_19 [1] : vector<8x8xf32> to vector<8xf32>
    %49 = vector.shape_cast %48 : vector<8xf32> to vector<8x1xf32>
    %50 = vector.broadcast %49 : vector<8x1xf32> to vector<8x8xf32>
    %51 = arith.divf %47, %50 : vector<8x8xf32>
    %52 = arith.truncf %51 : vector<8x8xf32> to vector<8x8xbf16>
    %cst_20 = arith.constant dense<0.000000e+00> : vector<8x32xf32>
    %53 = tpu.matmul %52, %3, %cst_20 {dimension_numbers = #tpu.dot_dimension_numbers<[1], [0], [0], [1], [0, 0, 1, 1], [], []>} : vector<8x8xbf16>, vector<8x32xbf16>, vector<8x32xf32> -> vector<8x32xf32>
    %54 = tpu.concatenate %40, %53 in 1 : vector<8x32xf32>, vector<8x32xf32> -> vector<8x64xf32>
    %55 = arith.truncf %54 : vector<8x64xf32> to vector<8x64xbf16>
    %cst_21 = arith.constant dense<0.000000e+00> : vector<8x512xf32>
    %56 = tpu.matmul %55, %7, %cst_21 {dimension_numbers = #tpu.dot_dimension_numbers<[1], [0], [0], [1], [0, 0, 1, 1], [], []>} : vector<8x64xbf16>, vector<64x512xbf16>, vector<8x512xf32> -> vector<8x512xf32>
    %57 = arith.addf %12, %56 : vector<8x512xf32>
    %58 = vector.extract_strided_slice %57 {offsets = [0, 0], sizes = [8, 128], strides = [1, 1]} : vector<8x512xf32> to vector<8x128xf32>
    %59 = arith.negf %58 : vector<8x128xf32>
    %60 = math.exp %59 : vector<8x128xf32>
    %cst_22 = arith.constant 1.000000e+00 : f32
    %61 = vector.broadcast %cst_22 : f32 to vector<8x128xf32>
    %62 = arith.addf %61, %60 : vector<8x128xf32>
    %63 = arith.divf %61, %62 : vector<8x128xf32>
    %64 = vector.extract_strided_slice %57 {offsets = [0, 128], sizes = [8, 128], strides = [1, 1]} : vector<8x512xf32> to vector<8x128xf32>
    %65 = arith.negf %64 : vector<8x128xf32>
    %66 = math.exp %65 : vector<8x128xf32>
    %cst_23 = arith.constant 1.000000e+00 : f32
    %67 = vector.broadcast %cst_23 : f32 to vector<8x128xf32>
    %68 = arith.addf %67, %66 : vector<8x128xf32>
    %69 = arith.divf %67, %68 : vector<8x128xf32>
    %70 = vector.extract_strided_slice %57 {offsets = [0, 256], sizes = [8, 128], strides = [1, 1]} : vector<8x512xf32> to vector<8x128xf32>
    %71 = math.tanh %70 : vector<8x128xf32>
    %72 = vector.extract_strided_slice %57 {offsets = [0, 384], sizes = [8, 128], strides = [1, 1]} : vector<8x512xf32> to vector<8x128xf32>
    %73 = arith.negf %72 : vector<8x128xf32>
    %74 = math.exp %73 : vector<8x128xf32>
    %cst_24 = arith.constant 1.000000e+00 : f32
    %75 = vector.broadcast %cst_24 : f32 to vector<8x128xf32>
    %76 = arith.addf %75, %74 : vector<8x128xf32>
    %77 = arith.divf %75, %76 : vector<8x128xf32>
    %78 = arith.mulf %69, %36 : vector<8x128xf32>
    %79 = arith.mulf %63, %71 : vector<8x128xf32>
    %80 = arith.addf %78, %79 : vector<8x128xf32>
    %81 = math.tanh %80 : vector<8x128xf32>
    %82 = arith.mulf %77, %81 : vector<8x128xf32>
    %83 = vector.extract_strided_slice %82 {offsets = [0, 0], sizes = [8, 32], strides = [1, 1]} : vector<8x128xf32> to vector<8x32xf32>
    %84 = arith.addf %1, %83 : vector<8x32xf32>
    %85 = arith.truncf %84 : vector<8x32xf32> to vector<8x32xbf16>
    %cst_25 = arith.constant dense<0.000000e+00> : vector<8x8xf32>
    %86 = tpu.matmul %85, %5, %cst_25 {dimension_numbers = #tpu.dot_dimension_numbers<[1], [0], [0], [1], [0, 0, 1, 1], [], []>} : vector<8x32xbf16>, vector<32x8xbf16>, vector<8x8xf32> -> vector<8x8xf32>
    %cst_26 = arith.constant dense<0xFF800000> : vector<8xf32>
    %87 = vector.multi_reduction <maximumf>, %86, %cst_26 [1] : vector<8x8xf32> to vector<8xf32>
    %88 = vector.shape_cast %87 : vector<8xf32> to vector<8x1xf32>
    %89 = vector.broadcast %88 : vector<8x1xf32> to vector<8x8xf32>
    %90 = arith.subf %86, %89 : vector<8x8xf32>
    %91 = math.exp %90 : vector<8x8xf32>
    %cst_27 = arith.constant dense<0.000000e+00> : vector<8xf32>
    %92 = vector.multi_reduction <add>, %91, %cst_27 [1] : vector<8x8xf32> to vector<8xf32>
    %93 = vector.shape_cast %92 : vector<8xf32> to vector<8x1xf32>
    %94 = vector.broadcast %93 : vector<8x1xf32> to vector<8x8xf32>
    %95 = arith.divf %91, %94 : vector<8x8xf32>
    %96 = arith.truncf %95 : vector<8x8xf32> to vector<8x8xbf16>
    %cst_28 = arith.constant dense<0.000000e+00> : vector<8x32xf32>
    %97 = tpu.matmul %96, %3, %cst_28 {dimension_numbers = #tpu.dot_dimension_numbers<[1], [0], [0], [1], [0, 0, 1, 1], [], []>} : vector<8x8xbf16>, vector<8x32xbf16>, vector<8x32xf32> -> vector<8x32xf32>
    %98 = tpu.concatenate %84, %97 in 1 : vector<8x32xf32>, vector<8x32xf32> -> vector<8x64xf32>
    %99 = arith.truncf %98 : vector<8x64xf32> to vector<8x64xbf16>
    %cst_29 = arith.constant dense<0.000000e+00> : vector<8x512xf32>
    %100 = tpu.matmul %99, %7, %cst_29 {dimension_numbers = #tpu.dot_dimension_numbers<[1], [0], [0], [1], [0, 0, 1, 1], [], []>} : vector<8x64xbf16>, vector<64x512xbf16>, vector<8x512xf32> -> vector<8x512xf32>
    %101 = arith.addf %12, %100 : vector<8x512xf32>
    %102 = vector.extract_strided_slice %101 {offsets = [0, 0], sizes = [8, 128], strides = [1, 1]} : vector<8x512xf32> to vector<8x128xf32>
    %103 = arith.negf %102 : vector<8x128xf32>
    %104 = math.exp %103 : vector<8x128xf32>
    %cst_30 = arith.constant 1.000000e+00 : f32
    %105 = vector.broadcast %cst_30 : f32 to vector<8x128xf32>
    %106 = arith.addf %105, %104 : vector<8x128xf32>
    %107 = arith.divf %105, %106 : vector<8x128xf32>
    %108 = vector.extract_strided_slice %101 {offsets = [0, 128], sizes = [8, 128], strides = [1, 1]} : vector<8x512xf32> to vector<8x128xf32>
    %109 = arith.negf %108 : vector<8x128xf32>
    %110 = math.exp %109 : vector<8x128xf32>
    %cst_31 = arith.constant 1.000000e+00 : f32
    %111 = vector.broadcast %cst_31 : f32 to vector<8x128xf32>
    %112 = arith.addf %111, %110 : vector<8x128xf32>
    %113 = arith.divf %111, %112 : vector<8x128xf32>
    %114 = vector.extract_strided_slice %101 {offsets = [0, 256], sizes = [8, 128], strides = [1, 1]} : vector<8x512xf32> to vector<8x128xf32>
    %115 = math.tanh %114 : vector<8x128xf32>
    %116 = vector.extract_strided_slice %101 {offsets = [0, 384], sizes = [8, 128], strides = [1, 1]} : vector<8x512xf32> to vector<8x128xf32>
    %117 = arith.negf %116 : vector<8x128xf32>
    %118 = math.exp %117 : vector<8x128xf32>
    %cst_32 = arith.constant 1.000000e+00 : f32
    %119 = vector.broadcast %cst_32 : f32 to vector<8x128xf32>
    %120 = arith.addf %119, %118 : vector<8x128xf32>
    %121 = arith.divf %119, %120 : vector<8x128xf32>
    %122 = arith.mulf %113, %80 : vector<8x128xf32>
    %123 = arith.mulf %107, %115 : vector<8x128xf32>
    %124 = arith.addf %122, %123 : vector<8x128xf32>
    %125 = math.tanh %124 : vector<8x128xf32>
    %126 = arith.mulf %121, %125 : vector<8x128xf32>
    %127 = vector.extract_strided_slice %126 {offsets = [0, 0], sizes = [8, 32], strides = [1, 1]} : vector<8x128xf32> to vector<8x32xf32>
    %128 = arith.addf %1, %127 : vector<8x32xf32>
    %129 = arith.truncf %128 : vector<8x32xf32> to vector<8x32xbf16>
    %cst_33 = arith.constant dense<0.000000e+00> : vector<8x8xf32>
    %130 = tpu.matmul %129, %5, %cst_33 {dimension_numbers = #tpu.dot_dimension_numbers<[1], [0], [0], [1], [0, 0, 1, 1], [], []>} : vector<8x32xbf16>, vector<32x8xbf16>, vector<8x8xf32> -> vector<8x8xf32>
    %cst_34 = arith.constant dense<0xFF800000> : vector<8xf32>
    %131 = vector.multi_reduction <maximumf>, %130, %cst_34 [1] : vector<8x8xf32> to vector<8xf32>
    %132 = vector.shape_cast %131 : vector<8xf32> to vector<8x1xf32>
    %133 = vector.broadcast %132 : vector<8x1xf32> to vector<8x8xf32>
    %134 = arith.subf %130, %133 : vector<8x8xf32>
    %135 = math.exp %134 : vector<8x8xf32>
    %cst_35 = arith.constant dense<0.000000e+00> : vector<8xf32>
    %136 = vector.multi_reduction <add>, %135, %cst_35 [1] : vector<8x8xf32> to vector<8xf32>
    %137 = vector.shape_cast %136 : vector<8xf32> to vector<8x1xf32>
    %138 = vector.broadcast %137 : vector<8x1xf32> to vector<8x8xf32>
    %139 = arith.divf %135, %138 : vector<8x8xf32>
    %140 = arith.truncf %139 : vector<8x8xf32> to vector<8x8xbf16>
    %cst_36 = arith.constant dense<0.000000e+00> : vector<8x32xf32>
    %141 = tpu.matmul %140, %3, %cst_36 {dimension_numbers = #tpu.dot_dimension_numbers<[1], [0], [0], [1], [0, 0, 1, 1], [], []>} : vector<8x8xbf16>, vector<8x32xbf16>, vector<8x32xf32> -> vector<8x32xf32>
    %142 = tpu.concatenate %128, %141 in 1 : vector<8x32xf32>, vector<8x32xf32> -> vector<8x64xf32>
    %143 = arith.truncf %142 : vector<8x64xf32> to vector<8x64xbf16>
    %cst_37 = arith.constant dense<0.000000e+00> : vector<8x512xf32>
    %144 = tpu.matmul %143, %7, %cst_37 {dimension_numbers = #tpu.dot_dimension_numbers<[1], [0], [0], [1], [0, 0, 1, 1], [], []>} : vector<8x64xbf16>, vector<64x512xbf16>, vector<8x512xf32> -> vector<8x512xf32>
    %145 = arith.addf %12, %144 : vector<8x512xf32>
    %146 = vector.extract_strided_slice %145 {offsets = [0, 0], sizes = [8, 128], strides = [1, 1]} : vector<8x512xf32> to vector<8x128xf32>
    %147 = arith.negf %146 : vector<8x128xf32>
    %148 = math.exp %147 : vector<8x128xf32>
    %cst_38 = arith.constant 1.000000e+00 : f32
    %149 = vector.broadcast %cst_38 : f32 to vector<8x128xf32>
    %150 = arith.addf %149, %148 : vector<8x128xf32>
    %151 = arith.divf %149, %150 : vector<8x128xf32>
    %152 = vector.extract_strided_slice %145 {offsets = [0, 128], sizes = [8, 128], strides = [1, 1]} : vector<8x512xf32> to vector<8x128xf32>
    %153 = arith.negf %152 : vector<8x128xf32>
    %154 = math.exp %153 : vector<8x128xf32>
    %cst_39 = arith.constant 1.000000e+00 : f32
    %155 = vector.broadcast %cst_39 : f32 to vector<8x128xf32>
    %156 = arith.addf %155, %154 : vector<8x128xf32>
    %157 = arith.divf %155, %156 : vector<8x128xf32>
    %158 = vector.extract_strided_slice %145 {offsets = [0, 256], sizes = [8, 128], strides = [1, 1]} : vector<8x512xf32> to vector<8x128xf32>
    %159 = math.tanh %158 : vector<8x128xf32>
    %160 = vector.extract_strided_slice %145 {offsets = [0, 384], sizes = [8, 128], strides = [1, 1]} : vector<8x512xf32> to vector<8x128xf32>
    %161 = arith.negf %160 : vector<8x128xf32>
    %162 = math.exp %161 : vector<8x128xf32>
    %cst_40 = arith.constant 1.000000e+00 : f32
    %163 = vector.broadcast %cst_40 : f32 to vector<8x128xf32>
    %164 = arith.addf %163, %162 : vector<8x128xf32>
    %165 = arith.divf %163, %164 : vector<8x128xf32>
    %166 = arith.mulf %157, %124 : vector<8x128xf32>
    %167 = arith.mulf %151, %159 : vector<8x128xf32>
    %168 = arith.addf %166, %167 : vector<8x128xf32>
    %169 = math.tanh %168 : vector<8x128xf32>
    %170 = arith.mulf %165, %169 : vector<8x128xf32>
    %171 = vector.extract_strided_slice %170 {offsets = [0, 0], sizes = [8, 32], strides = [1, 1]} : vector<8x128xf32> to vector<8x32xf32>
    %172 = arith.addf %1, %171 : vector<8x32xf32>
    %173 = arith.truncf %172 : vector<8x32xf32> to vector<8x32xbf16>
    %cst_41 = arith.constant dense<0.000000e+00> : vector<8x8xf32>
    %174 = tpu.matmul %173, %5, %cst_41 {dimension_numbers = #tpu.dot_dimension_numbers<[1], [0], [0], [1], [0, 0, 1, 1], [], []>} : vector<8x32xbf16>, vector<32x8xbf16>, vector<8x8xf32> -> vector<8x8xf32>
    %c0_42 = arith.constant 0 : index
    %c0_43 = arith.constant 0 : index
    %c0_44 = arith.constant 0 : index
    %175 = vector.load %arg6[%c0_42, %c0_43, %c0_44] : memref<1x8x8xf32, #tpu.memory_space<vmem>>, vector<1x8x8xf32>
    %176 = vector.shape_cast %175 : vector<1x8x8xf32> to vector<8x8xf32>
    %177 = vector.shape_cast %174 : vector<8x8xf32> to vector<1x8x8xf32>
    tpu.vector_store %arg6[%c0_42, %c0_43, %c0_44], %177 {strides = array<i32>} : memref<1x8x8xf32, #tpu.memory_space<vmem>>, vector<1x8x8xf32>,
    return
  }
  func.func @transform_0(%arg0: i32) -> (i32, i32, i32) {
    %c0_i32 = arith.constant 0 : i32
    %c0_i32_0 = arith.constant 0 : i32
    %c0_i32_1 = arith.constant 0 : i32
    return %arg0, %c0_i32, %c0_i32_0 : i32, i32, i32
  }
  func.func @transform_1(%arg0: i32) -> (i32, i32, i32) {
    %c0_i32 = arith.constant 0 : i32
    %c0_i32_0 = arith.constant 0 : i32
    %c0_i32_1 = arith.constant 0 : i32
    return %arg0, %c0_i32, %c0_i32_0 : i32, i32, i32
  }
  func.func @transform_2(%arg0: i32) -> (i32, i32, i32) {
    %c0_i32 = arith.constant 0 : i32
    %c0_i32_0 = arith.constant 0 : i32
    %c0_i32_1 = arith.constant 0 : i32
    return %arg0, %c0_i32, %c0_i32_0 : i32, i32, i32
  }
  func.func @transform_3(%arg0: i32) -> (i32, i32) {
    %c0_i32 = arith.constant 0 : i32
    %c0_i32_0 = arith.constant 0 : i32
    %c0_i32_1 = arith.constant 0 : i32
    return %c0_i32, %c0_i32_0 : i32, i32
  }
  func.func @transform_4(%arg0: i32) -> (i32, i32) {
    %c0_i32 = arith.constant 0 : i32
    %c0_i32_0 = arith.constant 0 : i32
    %c0_i32_1 = arith.constant 0 : i32
    return %c0_i32, %c0_i32_0 : i32, i32
  }
  func.func @transform_5(%arg0: i32) -> (i32, i32, i32) {
    %c0_i32 = arith.constant 0 : i32
    %c0_i32_0 = arith.constant 0 : i32
    %c0_i32_1 = arith.constant 0 : i32
    return %arg0, %c0_i32, %c0_i32_0 : i32, i32, i32
  }
}

</mosaic_0001>

<llo_original>
// kernel: _matchnet_batched.1
$region0: #{_matchnet_batched.1}
  #allocation0 [shape = 'u32[]', space=smem, size = 0x4, offset = 0x4, fixed_abs, tag = 'smem constant byte address 0x4 - core index']
  #allocation1 [shape = 'u32[72,128]{1,0:T(1,128)}', space=vmem, size = 0x9000, scoped, tag = 'internal scratch']
  %s0 = inlined_call_operand.vmem [shape: f32[4,8,32], index: 0, kind: input, shape index: {}]
  %s1 = inlined_call_operand.vmem [shape: bf16[4,8,32], index: 1, kind: input, shape index: {}]
  %s2 = inlined_call_operand.vmem [shape: bf16[4,32,8], index: 2, kind: input, shape index: {}]
  %s3 = inlined_call_operand.hbm [shape: bf16[96,512], index: 3, kind: input, shape index: {}]
  %s4 = inlined_call_operand.vmem [shape: f32[1,512], index: 4, kind: input, shape index: {}]
  %s5 = inlined_call_operand.hbm [shape: f32[4,8,8], index: 5, kind: output, shape index: {}]
  %s6 = sld [smem:[#allocation0]]
  $region57: #{_matchnet_batched.1} parent=0
    _
  %s8 = ssub.s32 1, %s6
  %s9 = scalar_select 0, %s8, %s6
  $region1: #{_matchnet_batched.1} parent=0
    #allocation2 [shape = 'u8[98304]{0}', space=vmem, size = 0x18000, scoped, tag = 'input window, operand 3, single buffered']
    #allocation3 [shape = 's32[2]{0}', space=sflag, size = 0x8, scoped, tag = 'scoped memory for _matchnet_batched.1']
    #allocation4 [shape = 's32[2]{0}', space=sflag, size = 0x8, scoped, tag = 'scoped memory for _matchnet_batched.1']
    #allocation5 [shape = 'u8[8192]{0}', space=vmem, size = 0x2000, scoped, tag = 'output window, operand 0']
    %10 = vsyncpa [#allocation3], 0
    %11 = vsyncpa [#allocation4], 0
    %s12 = scalar_lea.sflag [#allocation4], 1
    %13 = vsyncpa %s12, 0
    loop: start=0, step=1, limit=6
    $region2: #{_matchnet_batched.1} parent=1 // loop_pre_header
      _
    $region3: #{_matchnet_batched.1} parent=1 // loop_header
      %s15 = sphi 0, %s19
      %p16 = scmp.ge.s32.totalorder %s15, 6
      %s25 = sphi 0, %s27
      %s28 = sphi 0, %s25
      %s29 = sphi 0, %s28
      %s45 = sphi 0, %s29
      %s51 = sphi 0, %s53
      %s54 = sphi 0, %s51
      %s55 = sphi 0, %s54
      %s71 = sphi 0, %s55
      %s77 = sphi 0, %s79
      %s80 = sphi 0, %s77
      %s81 = sphi 0, %s80
      %s97 = sphi 0, %s81
      %s101 = sphi 0, %s101
      %s103 = sphi 0, %s101
      %s104 = sphi 0, %s103
      %s118 = sphi 0, %s104
      %s122 = sphi 0, %s122
      %s124 = sphi 0, %s122
      %s125 = sphi 0, %s124
      %s139 = sphi 0, %s125
      %s145 = sphi 0, %s147
      %s148 = sphi 0, %s145
      %s149 = sphi 0, %s148
      %s165 = sphi 0, %s149
    $region4: #{_matchnet_batched.1} parent=1 // loop_header_branch
      %18 = sbr.rel (%p16) target = $region8
    $region5: #{_matchnet_batched.1} parent=1 // loop_body
      %s20 = ssub.s32 %s15, 1
      %s21 = ssub.s32 %s15, 2
      %s22 = sadd.s32 %s15, 1
      %s23 = ssub.s32 %s15, %s22
      %p24 = scmp.eq.s32.totalorder %s23, 0
      %s26 = sadd.s32 %s25, 1
      %s27 = scalar_select %p24, %s25, %s26
      %p30 = pneg %p24
      %p31 = scmp.eq.s32.totalorder %s15, 3
      %p32 = por %p30, %p31
      %p33 = scmp.ne.s32.totalorder %s25, %s28
      %p34 = scmp.eq.s32.totalorder %s15, 0
      %p35 = por %p33, %p34
      %p36 = scmp.ne.s32.totalorder %s25, %s28
      %p37 = scmp.eq.s32.totalorder %s20, 3
      %p38 = por %p36, %p37
      %p39 = scmp.ne.s32.totalorder %s28, %s29
      %p40 = scmp.eq.s32.totalorder %s20, 0
      %p41 = por %p39, %p40
      %p42 = scmp.ne.s32.totalorder %s28, %s29
      %p43 = scmp.eq.s32.totalorder %s21, 3
      %p44 = por %p42, %p43
      %p46 = scmp.ne.s32.totalorder %s29, %s45
      %p47 = scmp.eq.s32.totalorder %s21, 0
      %p48 = por %p46, %p47
      %s49 = ssub.s32 %s15, %s22
      %p50 = scmp.eq.s32.totalorder %s49, 0
      %s52 = sadd.s32 %s51, 1
      %s53 = scalar_select %p50, %s51, %s52
      %p56 = pneg %p50
      %p57 = scmp.eq.s32.totalorder %s15, 3
      %p58 = por %p56, %p57
      %p59 = scmp.ne.s32.totalorder %s51, %s54
      %p60 = scmp.eq.s32.totalorder %s15, 0
      %p61 = por %p59, %p60
      %p62 = scmp.ne.s32.totalorder %s51, %s54
      %p63 = scmp.eq.s32.totalorder %s20, 3
      %p64 = por %p62, %p63
      %p65 = scmp.ne.s32.totalorder %s54, %s55
      %p66 = scmp.eq.s32.totalorder %s20, 0
      %p67 = por %p65, %p66
      %p68 = scmp.ne.s32.totalorder %s54, %s55
      %p69 = scmp.eq.s32.totalorder %s21, 3
      %p70 = por %p68, %p69
      %p72 = scmp.ne.s32.totalorder %s55, %s71
      %p73 = scmp.eq.s32.totalorder %s21, 0
      %p74 = por %p72, %p73
      %s75 = ssub.s32 %s15, %s22
      %p76 = scmp.eq.s32.totalorder %s75, 0
      %s78 = sadd.s32 %s77, 1
      %s79 = scalar_select %p76, %s77, %s78
      %p82 = pneg %p76
      %p83 = scmp.eq.s32.totalorder %s15, 3
      %p84 = por %p82, %p83
      %p85 = scmp.ne.s32.totalorder %s77, %s80
      %p86 = scmp.eq.s32.totalorder %s15, 0
      %p87 = por %p85, %p86
      %p88 = scmp.ne.s32.totalorder %s77, %s80
      %p89 = scmp.eq.s32.totalorder %s20, 3
      %p90 = por %p88, %p89
      %p91 = scmp.ne.s32.totalorder %s80, %s81
      %p92 = scmp.eq.s32.totalorder %s20, 0
      %p93 = por %p91, %p92
      %p94 = scmp.ne.s32.totalorder %s80, %s81
      %p95 = scmp.eq.s32.totalorder %s21, 3
      %p96 = por %p94, %p95
      %p98 = scmp.ne.s32.totalorder %s81, %s97
      %p99 = scmp.eq.s32.totalorder %s21, 0
      %p100 = por %p98, %p99
      %s102 = sadd.s32 %s101, 1
      %p105 = scmp.eq.s32.totalorder %s15, 3
      %p106 = scmp.ne.s32.totalorder %s101, %s103
      %p107 = scmp.eq.s32.totalorder %s15, 0
      %p108 = por %p106, %p107
      %p109 = scmp.ne.s32.totalorder %s101, %s103
      %p110 = scmp.eq.s32.totalorder %s20, 3
      %p111 = por %p109, %p110
      %p112 = scmp.ne.s32.totalorder %s103, %s104
      %p113 = scmp.eq.s32.totalorder %s20, 0
      %p114 = por %p112, %p113
      %p115 = scmp.ne.s32.totalorder %s103, %s104
      %p116 = scmp.eq.s32.totalorder %s21, 3
      %p117 = por %p115, %p116
      %p119 = scmp.ne.s32.totalorder %s104, %s118
      %p120 = scmp.eq.s32.totalorder %s21, 0
      %p121 = por %p119, %p120
      %s123 = sadd.s32 %s122, 1
      %p126 = scmp.eq.s32.totalorder %s15, 3
      %p127 = scmp.ne.s32.totalorder %s122, %s124
      %p128 = scmp.eq.s32.totalorder %s15, 0
      %p129 = por %p127, %p128
      %p130 = scmp.ne.s32.totalorder %s122, %s124
      %p131 = scmp.eq.s32.totalorder %s20, 3
      %p132 = por %p130, %p131
      %p133 = scmp.ne.s32.totalorder %s124, %s125
      %p134 = scmp.eq.s32.totalorder %s20, 0
      %p135 = por %p133, %p134
      %p136 = scmp.ne.s32.totalorder %s124, %s125
      %p137 = scmp.eq.s32.totalorder %s21, 3
      %p138 = por %p136, %p137
      %p140 = scmp.ne.s32.totalorder %s125, %s139
      %p141 = scmp.eq.s32.totalorder %s21, 0
      %p142 = por %p140, %p141
      %s143 = ssub.s32 %s15, %s22
      %p144 = scmp.eq.s32.totalorder %s143, 0
      %s146 = sadd.s32 %s145, 1
      %s147 = scalar_select %p144, %s145, %s146
      %p150 = pneg %p144
      %p151 = scmp.eq.s32.totalorder %s15, 3
      %p152 = por %p150, %p151
      %p153 = scmp.ne.s32.totalorder %s145, %s148
      %p154 = scmp.eq.s32.totalorder %s15, 0
      %p155 = por %p153, %p154
      %p156 = scmp.ne.s32.totalorder %s145, %s148
      %p157 = scmp.eq.s32.totalorder %s20, 3
      %p158 = por %p156, %p157
      %p159 = scmp.ne.s32.totalorder %s148, %s149
      %p160 = scmp.eq.s32.totalorder %s20, 0
      %p161 = por %p159, %p160
      %p162 = scmp.ne.s32.totalorder %s148, %s149
      %p163 = scmp.eq.s32.totalorder %s21, 3
      %p164 = por %p162, %p163
      %p166 = scmp.ne.s32.totalorder %s149, %s165
      %p167 = scmp.eq.s32.totalorder %s21, 0
      %p168 = por %p166, %p167
      %p169 = scmp.le.s32.totalorder 1, %s15
      %p170 = scmp.lt.s32.totalorder %s15, 5
      %p171 = pnand %p169, %p170
      %p172 = pneg %p171
      // Predicated region
      $region9: #{_matchnet_batched.1} parent=5 // pred_check
        _
      $region10: #{_matchnet_batched.1} parent=5 // pred_check_branch
        %174 = sbr.rel (%p171) target = $region12
      $region11: #{_matchnet_batched.1} parent=5 // pred_region
        %s175 = ssub.s32 %s15, 1
        // Predicated region
        $region13: #{_matchnet_batched.1} parent=11 // pred_check
          %p176 = pneg %p114
        $region14: #{_matchnet_batched.1} parent=11 // pred_check_branch
          %178 = sbr.rel (%p176) target = $region16
        $region15: #{_matchnet_batched.1} parent=11 // pred_region
          %180 = vsyncadd [#allocation3], 0
          %s181 = sshll.u32 %s3, 4
          %s182 = int_to_ptr.hbm [resolvable:$true] %s181
          %s183 = sshll.u32 [#allocation2], 4
          %s184 = int_to_ptr.vmem [resolvable:$true] %s183
          %189 = dma.hbm_to_vmem [thread:$0]  %s182, 3072, %s184, [#allocation3], 256, 256, 16
        $region16: #{_matchnet_batched.1} parent=11 // pred_fallthru
          _
        // Predicated region
        $region17: #{_matchnet_batched.1} parent=11 // pred_check
          %p190 = pneg %p135
        $region18: #{_matchnet_batched.1} parent=11 // pred_check_branch
          %192 = sbr.rel (%p190) target = $region20
        $region19: #{_matchnet_batched.1} parent=11 // pred_region
          _
        $region20: #{_matchnet_batched.1} parent=11 // pred_fallthru
          _
      $region12: #{_matchnet_batched.1} parent=5 // pred_fallthru
        _
      %p193 = scmp.lt.s32.totalorder %s15, 4
      // Predicated region
      $region21: #{_matchnet_batched.1} parent=5 // pred_check
        %p194 = pneg %p193
      $region22: #{_matchnet_batched.1} parent=5 // pred_check_branch
        %196 = sbr.rel (%p194) target = $region24
      $region23: #{_matchnet_batched.1} parent=5 // pred_region
        // Predicated region
        $region25: #{_matchnet_batched.1} parent=23 // pred_check
          %p197 = pneg %p35
        $region26: #{_matchnet_batched.1} parent=23 // pred_check_branch
          %199 = sbr.rel (%p197) target = $region28
        $region27: #{_matchnet_batched.1} parent=23 // pred_region
          %p200 = scmp.lt.s32.totalorder %s15, 3
          %s201 = scalar_select %p200, %s15, 3
          %s202 = smul.addr %s201, 8
          %s203 = scalar_lea.vmem %s0, %s202
        $region28: #{_matchnet_batched.1} parent=23 // pred_fallthru
          _
        // Predicated region
        $region29: #{_matchnet_batched.1} parent=23 // pred_check
          %p204 = pneg %p61
        $region30: #{_matchnet_batched.1} parent=23 // pred_check_branch
          %206 = sbr.rel (%p204) target = $region32
        $region31: #{_matchnet_batched.1} parent=23 // pred_region
          %p207 = scmp.lt.s32.totalorder %s15, 3
          %s208 = scalar_select %p207, %s15, 3
          %s209 = smul.addr %s208, 4
          %s210 = scalar_lea.vmem %s1, %s209
        $region32: #{_matchnet_batched.1} parent=23 // pred_fallthru
          _
        // Predicated region
        $region33: #{_matchnet_batched.1} parent=23 // pred_check
          %p211 = pneg %p87
        $region34: #{_matchnet_batched.1} parent=23 // pred_check_branch
          %213 = sbr.rel (%p211) target = $region36
        $region35: #{_matchnet_batched.1} parent=23 // pred_region
          %p214 = scmp.lt.s32.totalorder %s15, 3
          %s215 = scalar_select %p214, %s15, 3
          %s216 = smul.addr %s215, 4
          %s217 = smul.addr %s216, 4
          %s218 = scalar_lea.vmem %s2, %s217
        $region36: #{_matchnet_batched.1} parent=23 // pred_fallthru
          _
      $region24: #{_matchnet_batched.1} parent=5 // pred_fallthru
        _
      %p219 = scmp.le.s32.totalorder 1, %s15
      %p220 = scmp.lt.s32.totalorder %s15, 5
      %p221 = pnand %p219, %p220
      %p222 = pneg %p221
      // Predicated region
      $region37: #{_matchnet_batched.1} parent=5 // pred_check
        _
      $region38: #{_matchnet_batched.1} parent=5 // pred_check_branch
        %224 = sbr.rel (%p221) target = $region40
      $region39: #{_matchnet_batched.1} parent=5 // pred_region
        %s225 = ssub.s32 %s15, 1
        // Predicated region
        $region41: #{_matchnet_batched.1} parent=39 // pred_check
          %p226 = pneg %p114
        $region42: #{_matchnet_batched.1} parent=39 // pred_check_branch
          %228 = sbr.rel (%p226) target = $region44
        $region43: #{_matchnet_batched.1} parent=39 // pred_region
          %230 = dma.done [#allocation3], 3072
        $region44: #{_matchnet_batched.1} parent=39 // pred_fallthru
          _
        %p231 = scmp.lt.s32.totalorder %s20, 3
        %s232 = scalar_select %p231, %s20, 3
        %s233 = smul.addr %s232, 8
        %s234 = scalar_lea.vmem %s0, %s233
        %p235 = pneg %p41
        %p236 = pneg %p38
        %p237 = scmp.lt.s32.totalorder %s20, 3
        %s238 = scalar_select %p237, %s20, 3
        %s239 = smul.addr %s238, 4
        %s240 = scalar_lea.vmem %s1, %s239
        %p241 = pneg %p67
        %p242 = pneg %p64
        %p243 = scmp.lt.s32.totalorder %s20, 3
        %s244 = scalar_select %p243, %s20, 3
        %s245 = smul.addr %s244, 4
        %s246 = smul.addr %s245, 4
        %s247 = scalar_lea.vmem %s2, %s246
        %p248 = pneg %p93
        %p249 = pneg %p90
        %p250 = pneg %p114
        %p251 = pneg %p111
        %p252 = pneg %p135
        %p253 = pneg %p132
        %p254 = pneg %p161
        %p255 = pneg %p158
        %s256 = sand.u32 %s148, 1
        %s257 = scalar_lea.sflag [#allocation4], %s256
        %s258 = sand.u32 %s148, 1
        %s259 = smul.addr %s258, 8
        %s260 = scalar_lea.vmem [#allocation5], %s259
        %p261 = scmp.lt.s32.totalorder %s20, 3
        %s262 = scalar_select %p261, %s20, 3
        %s263 = smul.addr %s262, 8
        %s264 = scalar_lea.vmem %s0, %s263
        %p265 = scmp.lt.s32.totalorder %s20, 3
        %s266 = scalar_select %p265, %s20, 3
        %s267 = smul.addr %s266, 4
        %s268 = scalar_lea.vmem %s1, %s267
        %p269 = scmp.lt.s32.totalorder %s20, 3
        %s270 = scalar_select %p269, %s20, 3
        %s271 = smul.addr %s270, 4
        %s272 = smul.addr %s271, 4
        %s273 = scalar_lea.vmem %s2, %s272
        %v275 = vld [vmem:[%s264] sm:$0xff]
        %v276 = vld [vmem:[%s268] sm:$0xf]
        %v277 = vld [vmem:[%s273] sm:$0xf]
        %v278 = vld [vmem:[%s273 + $0x4] sm:$0xf]
        %v279 = vld [vmem:[%s273 + $0x8] sm:$0xf]
        %v280 = vld [vmem:[%s273 + $0xc] sm:$0xf]
        %v281 = vld [vmem:[#allocation2] sm:$0xff]
        %v282 = vld [vmem:[#allocation2 + $0x8] sm:$0xff]
        %v283 = vld [vmem:[#allocation2 + $0x10] sm:$0xff]
        %v284 = vld [vmem:[#allocation2 + $0x18] sm:$0xff]
        %v285 = vld [vmem:[#allocation2 + $0x20] sm:$0xff]
        %v286 = vld [vmem:[#allocation2 + $0x28] sm:$0xff]
        %v287 = vld [vmem:[#allocation2 + $0x30] sm:$0xff]
        %v288 = vld [vmem:[#allocation2 + $0x38] sm:$0xff]
        %v289 = vld [vmem:[#allocation2 + $0x40] sm:$0xff]
        %v290 = vld [vmem:[#allocation2 + $0x48] sm:$0xff]
        %v291 = vld [vmem:[#allocation2 + $0x50] sm:$0xff]
        %v292 = vld [vmem:[#allocation2 + $0x58] sm:$0xff]
        %v293 = vld [vmem:[#allocation2 + $0x60] sm:$0xff]
        %v294 = vld [vmem:[#allocation2 + $0x68] sm:$0xff]
        %v295 = vld [vmem:[#allocation2 + $0x70] sm:$0xff]
        %v296 = vld [vmem:[#allocation2 + $0x78] sm:$0xff]
        %v297 = vld [vmem:[#allocation2 + $0x80] sm:$0xff]
        %v298 = vld [vmem:[#allocation2 + $0x88] sm:$0xff]
        %v299 = vld [vmem:[#allocation2 + $0x90] sm:$0xff]
        %v300 = vld [vmem:[#allocation2 + $0x98] sm:$0xff]
        %v301 = vld [vmem:[#allocation2 + $0xa0] sm:$0xff]
        %v302 = vld [vmem:[#allocation2 + $0xa8] sm:$0xff]
        %v303 = vld [vmem:[#allocation2 + $0xb0] sm:$0xff]
        %v304 = vld [vmem:[#allocation2 + $0xb8] sm:$0xff]
        %v305 = vld [vmem:[%s4] sm:$0xf]
        %v306 = vpack.c.bf16 %v275, %v275
        %v308 = vperm.slane %v305, 0
        %v309 = vperm.slane %v305, 1
        %v310 = vperm.slane %v305, 2
        %v311 = vperm.slane %v305, 3
        %v324 = vunpack.c.l.b16 %v281
        %v325 = vunpack.c.h.b16 %v281
        %v326 = vunpack.c.l.b16 %v282
        %v327 = vunpack.c.h.b16 %v282
        %v328 = vunpack.c.l.b16 %v283
        %v329 = vunpack.c.h.b16 %v283
        %v330 = vunpack.c.l.b16 %v284
        %v331 = vunpack.c.h.b16 %v284
        %v332 = vunpack.c.l.b16 %v285
        %v333 = vunpack.c.h.b16 %v285
        %v334 = vunpack.c.l.b16 %v286
        %v335 = vunpack.c.h.b16 %v286
        %v336 = vunpack.c.l.b16 %v287
        %v337 = vunpack.c.h.b16 %v287
        %v338 = vunpack.c.l.b16 %v288
        %v339 = vunpack.c.h.b16 %v288
        %v340 = vpack.c.b16 %v328, %v324
        %v341 = vpack.c.b16 %v329, %v325
        %v342 = vpack.c.b16 %v330, %v326
        %v343 = vpack.c.b16 %v331, %v327
        %v344 = vpack.c.b16 %v336, %v332
        %v345 = vpack.c.b16 %v337, %v333
        %v346 = vpack.c.b16 %v338, %v334
        %v347 = vpack.c.b16 %v339, %v335
        %vm356 = vcmask 261120
        %v358 = vsel %vm356, %v306, 0
        %360 = vmatpush.bf16.msra.mxu0 0
        %361 = vmatpush.bf16.msra.mxu0 0
        %362 = vmatpush.bf16.msra.mxu0 0
        %363 = vmatpush.bf16.msra.mxu0 0
        %364 = vmatpush.bf16.msra.mxu0 0
        %365 = vmatpush.bf16.msra.mxu0 0
        %366 = vmatpush.bf16.msra.mxu0 %v344
        %367 = vmatpush.bf16.msra.mxu0 %v340
        %368 = vmatmul.bf16.gmra.mxu0 %v358
        %v369 = vpop.f32.mrf.mxu0
        %v370 = vadd.f32 %v308, %v369
        %v371 = vpop.f32.mrf.mxu0
        %372 = vdwg.mxu0
        %373 = vmatpush.bf16.msra.mxu0 0
        %374 = vmatpush.bf16.msra.mxu0 0
        %375 = vmatpush.bf16.msra.mxu0 0
        %376 = vmatpush.bf16.msra.mxu0 0
        %377 = vmatpush.bf16.msra.mxu0 0
        %378 = vmatpush.bf16.msra.mxu0 0
        %379 = vmatpush.bf16.msra.mxu0 %v345
        %380 = vmatpush.bf16.msra.mxu0 %v341
        %381 = vmatmul.bf16.gmra.mxu0 %v358
        %v382 = vpop.f32.mrf.mxu0
        %v383 = vadd.f32 %v309, %v382
        %v384 = vpop.f32.mrf.mxu0
        %385 = vdwg.mxu0
        %386 = vmatpush.bf16.msra.mxu0 0
        %387 = vmatpush.bf16.msra.mxu0 0
        %388 = vmatpush.bf16.msra.mxu0 0
        %389 = vmatpush.bf16.msra.mxu0 0
        %390 = vmatpush.bf16.msra.mxu0 0
        %391 = vmatpush.bf16.msra.mxu0 0
        %392 = vmatpush.bf16.msra.mxu0 %v346
        %393 = vmatpush.bf16.msra.mxu0 %v342
        %394 = vmatmul.bf16.gmra.mxu0 %v358
        %v395 = vpop.f32.mrf.mxu0
        %v396 = vadd.f32 %v310, %v395
        %v397 = vpop.f32.mrf.mxu0
        %398 = vdwg.mxu0
        %399 = vmatpush.bf16.msra.mxu0 0
        %400 = vmatpush.bf16.msra.mxu0 0
        %401 = vmatpush.bf16.msra.mxu0 0
        %402 = vmatpush.bf16.msra.mxu0 0
        %403 = vmatpush.bf16.msra.mxu0 0
        %404 = vmatpush.bf16.msra.mxu0 0
        %405 = vmatpush.bf16.msra.mxu0 %v347
        %406 = vmatpush.bf16.msra.mxu0 %v343
        %407 = vmatmul.bf16.gmra.mxu0 %v358
        %v408 = vpop.f32.mrf.mxu0
        %v409 = vadd.f32 %v311, %v408
        %v410 = vpop.f32.mrf.mxu0
        %411 = vdwg.mxu0
        %v412 = vxor.u32 %v370, 2147483648
        %v413 = vmul.f32 %v412, 1.442695
        %v414 = vpow.pop %v413
        %v415 = vadd.f32 %v414, 1.0
        %v416 = vrcp.pop %v415
        %v417 = vmul.f32 %v415, %v416
        %v418 = vsub.f32 1.0, %v417
        %v419 = vmul.f32 %v416, %v418
        %v420 = vadd.f32 %v416, %v419
        %vm421 = vweird.f32 %v415
        %vm422 = vweird.f32 %v416
        %vm423 = vmor %vm421, %vm422
        %v424 = vsel %vm423, %v416, %v420
        %v425 = vand.u32 2147483647, %v415
        %vm426 = vcmp.eq.f32.partialorder %v425, 8.507059e+37
        %v427 = vand.u32 %v415, 2147483648
        %v428 = vor.u32 1.1754944e-38, %v427
        %v429 = vsel %vm426, %v428, %v424
        %v430 = vmul.f32 1.0, %v429
        %v431 = vxor.u32 %v383, 2147483648
        %v432 = vmul.f32 %v431, 1.442695
        %v433 = vpow.pop %v432
        %v434 = vadd.f32 %v433, 1.0
        %v435 = vrcp.pop %v434
        %v436 = vmul.f32 %v434, %v435
        %v437 = vsub.f32 1.0, %v436
        %v438 = vmul.f32 %v435, %v437
        %v439 = vadd.f32 %v435, %v438
        %vm440 = vweird.f32 %v434
        %vm441 = vweird.f32 %v435
        %vm442 = vmor %vm440, %vm441
        %v443 = vsel %vm442, %v435, %v439
        %v444 = vand.u32 2147483647, %v434
        %vm445 = vcmp.eq.f32.partialorder %v444, 8.507059e+37
        %v446 = vand.u32 %v434, 2147483648
        %v447 = vor.u32 1.1754944e-38, %v446
        %v448 = vsel %vm445, %v447, %v443
        %v449 = vmul.f32 1.0, %v448
        %v450 = vtanh.pop %v396
        %v451 = vxor.u32 %v409, 2147483648
        %v452 = vmul.f32 %v451, 1.442695
        %v453 = vpow.pop %v452
        %v454 = vadd.f32 %v453, 1.0
        %v455 = vrcp.pop %v454
        %v456 = vmul.f32 %v454, %v455
        %v457 = vsub.f32 1.0, %v456
        %v458 = vmul.f32 %v455, %v457
        %v459 = vadd.f32 %v455, %v458
        %vm460 = vweird.f32 %v454
        %vm461 = vweird.f32 %v455
        %vm462 = vmor %vm460, %vm461
        %v463 = vsel %vm462, %v455, %v459
        %v464 = vand.u32 2147483647, %v454
        %vm465 = vcmp.eq.f32.partialorder %v464, 8.507059e+37
        %v466 = vand.u32 %v454, 2147483648
        %v467 = vor.u32 1.1754944e-38, %v466
        %v468 = vsel %vm465, %v467, %v463
        %v469 = vmul.f32 1.0, %v468
        %v470 = vmul.f32 %v449, 0.0
        %v471 = vmul.f32 %v430, %v450
        %v472 = vadd.f32 %v470, %v471
        %v473 = vtanh.pop %v472
        %v474 = vmul.f32 %v469, %v473
        %v475 = vadd.f32 %v275, %v474
        %v476 = vpack.c.bf16 %v475, %v475
        %v481 = vunpack.c.l.b16 %v277
        %v482 = vunpack.c.l.b16 %v278
        %v483 = vunpack.c.l.b16 %v279
        %v484 = vunpack.c.l.b16 %v280
        %v485 = vpack.c.b16 %v482, %v481
        %v486 = vpack.c.b16 %v484, %v483
        %v490 = vsel %vm356, %v476, 0
        %492 = vmatpush.bf16.msra.mxu0 0
        %493 = vmatpush.bf16.msra.mxu0 0
        %494 = vmatpush.bf16.msra.mxu0 0
        %495 = vmatpush.bf16.msra.mxu0 0
        %496 = vmatpush.bf16.msra.mxu0 0
        %497 = vmatpush.bf16.msra.mxu0 0
        %498 = vmatpush.bf16.msra.mxu0 %v486
        %499 = vmatpush.bf16.msra.mxu0 %v485
        %500 = vmatmul.bf16.gmra.mxu0 %v490
        %v501 = vpop.f32.mrf.mxu0
        %v502 = vadd.f32 0.0, %v501
        %v503 = vpop.f32.mrf.mxu0
        %504 = vdwg.mxu0
        %vm505 = vcmask 64512
        %v506 = vsel %vm505, %v502, -inf
        %507 = vmax.xlane.f32.xlu0 %v506
        %v508 = vpop.xlane.xlu0 %507
        %v509 = vsub.f32 %v502, %v508
        %v510 = vmul.f32 %v509, 1.442695
        %v511 = vpow.pop %v510
        %v512 = vsel %vm505, %v511, 0.0
        %513 = vadd.xlane.f32.xlu0 %v512
        %v514 = vpop.xlane.xlu0 %513
        %v515 = vrcp.pop %v514
        %v516 = vmul.f32 %v514, %v515
        %v517 = vsub.f32 1.0, %v516
        %v518 = vmul.f32 %v515, %v517
        %v519 = vadd.f32 %v515, %v518
        %vm520 = vweird.f32 %v514
        %vm521 = vweird.f32 %v515
        %vm522 = vmor %vm520, %vm521
        %v523 = vsel %vm522, %v515, %v519
        %v524 = vand.u32 2147483647, %v514
        %vm525 = vcmp.eq.f32.partialorder %v524, 8.507059e+37
        %v526 = vand.u32 %v514, 2147483648
        %v527 = vor.u32 1.1754944e-38, %v526
        %v528 = vsel %vm525, %v527, %v523
        %v529 = vmul.f32 %v511, %v528
        %v530 = vpack.c.bf16 %v529, %v529
        %v532 = vsel %vm505, %v530, 0
        %vm534 = vcmask 1043456
        %v536 = vsel %vm534, %v276, 0
        %538 = vmatpush.bf16.msra.mxu0 0
        %539 = vmatpush.bf16.msra.mxu0 0
        %540 = vmatpush.bf16.msra.mxu0 0
        %541 = vmatpush.bf16.msra.mxu0 0
        %542 = vmatpush.bf16.msra.mxu0 0
        %543 = vmatpush.bf16.msra.mxu0 0
        %544 = vmatpush.bf16.msra.mxu0 0
        %545 = vmatpush.bf16.msra.mxu0 %v536
        %546 = vmatmul.bf16.gmra.mxu0 %v532
        %v547 = vpop.f32.mrf.mxu0
        %v548 = vadd.f32 0.0, %v547
        %v549 = vpop.f32.mrf.mxu0
        %550 = vdwg.mxu0
        %552 = vrot.lane.b32.xlu0 %v548, 32
        %v553 = vpop.permute.xlu0 %552
        %v555 = vsel %vm356, %v475, %v553
        %v556 = vpack.c.bf16 %v555, %v555
        %v573 = vunpack.c.l.b16 %v289
        %v574 = vunpack.c.h.b16 %v289
        %v575 = vunpack.c.l.b16 %v290
        %v576 = vunpack.c.h.b16 %v290
        %v577 = vunpack.c.l.b16 %v291
        %v578 = vunpack.c.h.b16 %v291
        %v579 = vunpack.c.l.b16 %v292
        %v580 = vunpack.c.h.b16 %v292
        %v581 = vunpack.c.l.b16 %v293
        %v582 = vunpack.c.h.b16 %v293
        %v583 = vunpack.c.l.b16 %v294
        %v584 = vunpack.c.h.b16 %v294
        %v585 = vunpack.c.l.b16 %v295
        %v586 = vunpack.c.h.b16 %v295
        %v587 = vunpack.c.l.b16 %v296
        %v588 = vunpack.c.h.b16 %v296
        %v589 = vunpack.c.l.b16 %v297
        %v590 = vunpack.c.h.b16 %v297
        %v591 = vunpack.c.l.b16 %v298
        %v592 = vunpack.c.h.b16 %v298
        %v593 = vunpack.c.l.b16 %v299
        %v594 = vunpack.c.h.b16 %v299
        %v595 = vunpack.c.l.b16 %v300
        %v596 = vunpack.c.h.b16 %v300
        %v597 = vunpack.c.l.b16 %v301
        %v598 = vunpack.c.h.b16 %v301
        %v599 = vunpack.c.l.b16 %v302
        %v600 = vunpack.c.h.b16 %v302
        %v601 = vunpack.c.l.b16 %v303
        %v602 = vunpack.c.h.b16 %v303
        %v603 = vunpack.c.l.b16 %v304
        %v604 = vunpack.c.h.b16 %v304
        %v605 = vpack.c.b16 %v577, %v573
        %v606 = vpack.c.b16 %v578, %v574
        %v607 = vpack.c.b16 %v579, %v575
        %v608 = vpack.c.b16 %v580, %v576
        %v609 = vpack.c.b16 %v585, %v581
        %v610 = vpack.c.b16 %v586, %v582
        %v611 = vpack.c.b16 %v587, %v583
        %v612 = vpack.c.b16 %v588, %v584
        %v613 = vpack.c.b16 %v593, %v589
        %v614 = vpack.c.b16 %v594, %v590
        %v615 = vpack.c.b16 %v595, %v591
        %v616 = vpack.c.b16 %v596, %v592
        %v617 = vpack.c.b16 %v601, %v597
        %v618 = vpack.c.b16 %v602, %v598
        %v619 = vpack.c.b16 %v603, %v599
        %v620 = vpack.c.b16 %v604, %v600
        %vm637 = vcmask 523264
        %v639 = vsel %vm637, %v556, 0
        %641 = vmatpush.bf16.msra.mxu0 0
        %642 = vmatpush.bf16.msra.mxu0 0
        %643 = vmatpush.bf16.msra.mxu0 0
        %644 = vmatpush.bf16.msra.mxu0 0
        %645 = vmatpush.bf16.msra.mxu0 %v617
        %646 = vmatpush.bf16.msra.mxu0 %v613
        %647 = vmatpush.bf16.msra.mxu0 %v609
        %648 = vmatpush.bf16.msra.mxu0 %v605
        %649 = vmatmul.bf16.gmra.mxu0 %v639
        %v650 = vpop.f32.mrf.mxu0
        %v651 = vadd.f32 0.0, %v650
        %v652 = vpop.f32.mrf.mxu0
        %653 = vdwg.mxu0
        %654 = vmatpush.bf16.msra.mxu0 0
        %655 = vmatpush.bf16.msra.mxu0 0
        %656 = vmatpush.bf16.msra.mxu0 0
        %657 = vmatpush.bf16.msra.mxu0 0
        %658 = vmatpush.bf16.msra.mxu0 %v618
        %659 = vmatpush.bf16.msra.mxu0 %v614
        %660 = vmatpush.bf16.msra.mxu0 %v610
        %661 = vmatpush.bf16.msra.mxu0 %v606
        %662 = vmatmul.bf16.gmra.mxu0 %v639
        %v663 = vpop.f32.mrf.mxu0
        %v664 = vadd.f32 0.0, %v663
        %v665 = vpop.f32.mrf.mxu0
        %666 = vdwg.mxu0
        %667 = vmatpush.bf16.msra.mxu0 0
        %668 = vmatpush.bf16.msra.mxu0 0
        %669 = vmatpush.bf16.msra.mxu0 0
        %670 = vmatpush.bf16.msra.mxu0 0
        %671 = vmatpush.bf16.msra.mxu0 %v619
        %672 = vmatpush.bf16.msra.mxu0 %v615
        %673 = vmatpush.bf16.msra.mxu0 %v611
        %674 = vmatpush.bf16.msra.mxu0 %v607
        %675 = vmatmul.bf16.gmra.mxu0 %v639
        %v676 = vpop.f32.mrf.mxu0
        %v677 = vadd.f32 0.0, %v676
        %v678 = vpop.f32.mrf.mxu0
        %679 = vdwg.mxu0
        %680 = vmatpush.bf16.msra.mxu0 0
        %681 = vmatpush.bf16.msra.mxu0 0
        %682 = vmatpush.bf16.msra.mxu0 0
        %683 = vmatpush.bf16.msra.mxu0 0
        %684 = vmatpush.bf16.msra.mxu0 %v620
        %685 = vmatpush.bf16.msra.mxu0 %v616
        %686 = vmatpush.bf16.msra.mxu0 %v612
        %687 = vmatpush.bf16.msra.mxu0 %v608
        %688 = vmatmul.bf16.gmra.mxu0 %v639
        %v689 = vpop.f32.mrf.mxu0
        %v690 = vadd.f32 0.0, %v689
        %v691 = vpop.f32.mrf.mxu0
        %692 = vdwg.mxu0
        %v693 = vadd.f32 %v370, %v651
        %v694 = vadd.f32 %v383, %v664
        %v695 = vadd.f32 %v396, %v677
        %v696 = vadd.f32 %v409, %v690
        %v697 = vxor.u32 %v693, 2147483648
        %v698 = vmul.f32 %v697, 1.442695
        %v699 = vpow.pop %v698
        %v700 = vadd.f32 %v699, 1.0
        %v701 = vrcp.pop %v700
        %v702 = vmul.f32 %v700, %v701
        %v703 = vsub.f32 1.0, %v702
        %v704 = vmul.f32 %v701, %v703
        %v705 = vadd.f32 %v701, %v704
        %vm706 = vweird.f32 %v700
        %vm707 = vweird.f32 %v701
        %vm708 = vmor %vm706, %vm707
        %v709 = vsel %vm708, %v701, %v705
        %v710 = vand.u32 2147483647, %v700
        %vm711 = vcmp.eq.f32.partialorder %v710, 8.507059e+37
        %v712 = vand.u32 %v700, 2147483648
        %v713 = vor.u32 1.1754944e-38, %v712
        %v714 = vsel %vm711, %v713, %v709
        %v715 = vmul.f32 1.0, %v714
        %v716 = vxor.u32 %v694, 2147483648
        %v717 = vmul.f32 %v716, 1.442695
        %v718 = vpow.pop %v717
        %v719 = vadd.f32 %v718, 1.0
        %v720 = vrcp.pop %v719
        %v721 = vmul.f32 %v719, %v720
        %v722 = vsub.f32 1.0, %v721
        %v723 = vmul.f32 %v720, %v722
        %v724 = vadd.f32 %v720, %v723
        %vm725 = vweird.f32 %v719
        %vm726 = vweird.f32 %v720
        %vm727 = vmor %vm725, %vm726
        %v728 = vsel %vm727, %v720, %v724
        %v729 = vand.u32 2147483647, %v719
        %vm730 = vcmp.eq.f32.partialorder %v729, 8.507059e+37
        %v731 = vand.u32 %v719, 2147483648
        %v732 = vor.u32 1.1754944e-38, %v731
        %v733 = vsel %vm730, %v732, %v728
        %v734 = vmul.f32 1.0, %v733
        %v735 = vtanh.pop %v695
        %v736 = vxor.u32 %v696, 2147483648
        %v737 = vmul.f32 %v736, 1.442695
        %v738 = vpow.pop %v737
        %v739 = vadd.f32 %v738, 1.0
        %v740 = vrcp.pop %v739
        %v741 = vmul.f32 %v739, %v740
        %v742 = vsub.f32 1.0, %v741
        %v743 = vmul.f32 %v740, %v742
        %v744 = vadd.f32 %v740, %v743
        %vm745 = vweird.f32 %v739
        %vm746 = vweird.f32 %v740
        %vm747 = vmor %vm745, %vm746
        %v748 = vsel %vm747, %v740, %v744
        %v749 = vand.u32 2147483647, %v739
        %vm750 = vcmp.eq.f32.partialorder %v749, 8.507059e+37
        %v751 = vand.u32 %v739, 2147483648
        %v752 = vor.u32 1.1754944e-38, %v751
        %v753 = vsel %vm750, %v752, %v748
        %v754 = vmul.f32 1.0, %v753
        %v755 = vmul.f32 %v734, %v472
        %v756 = vmul.f32 %v715, %v735
        %v757 = vadd.f32 %v755, %v756
        %v758 = vtanh.pop %v757
        %v759 = vmul.f32 %v754, %v758
        %v760 = vadd.f32 %v275, %v759
        %v761 = vpack.c.bf16 %v760, %v760
        %v763 = vsel %vm356, %v761, 0
        %765 = vmatpush.bf16.msra.mxu0 0
        %766 = vmatpush.bf16.msra.mxu0 0
        %767 = vmatpush.bf16.msra.mxu0 0
        %768 = vmatpush.bf16.msra.mxu0 0
        %769 = vmatpush.bf16.msra.mxu0 0
        %770 = vmatpush.bf16.msra.mxu0 0
        %771 = vmatpush.bf16.msra.mxu0 %v486
        %772 = vmatpush.bf16.msra.mxu0 %v485
        %773 = vmatmul.bf16.gmra.mxu0 %v763
        %v774 = vpop.f32.mrf.mxu0
        %v775 = vadd.f32 0.0, %v774
        %v776 = vpop.f32.mrf.mxu0
        %777 = vdwg.mxu0
        %v778 = vsel %vm505, %v775, -inf
        %779 = vmax.xlane.f32.xlu0 %v778
        %v780 = vpop.xlane.xlu0 %779
        %v781 = vsub.f32 %v775, %v780
        %v782 = vmul.f32 %v781, 1.442695
        %v783 = vpow.pop %v782
        %v784 = vsel %vm505, %v783, 0.0
        %785 = vadd.xlane.f32.xlu0 %v784
        %v786 = vpop.xlane.xlu0 %785
        %v787 = vrcp.pop %v786
        %v788 = vmul.f32 %v786, %v787
        %v789 = vsub.f32 1.0, %v788
        %v790 = vmul.f32 %v787, %v789
        %v791 = vadd.f32 %v787, %v790
        %vm792 = vweird.f32 %v786
        %vm793 = vweird.f32 %v787
        %vm794 = vmor %vm792, %vm793
        %v795 = vsel %vm794, %v787, %v791
        %v796 = vand.u32 2147483647, %v786
        %vm797 = vcmp.eq.f32.partialorder %v796, 8.507059e+37
        %v798 = vand.u32 %v786, 2147483648
        %v799 = vor.u32 1.1754944e-38, %v798
        %v800 = vsel %vm797, %v799, %v795
        %v801 = vmul.f32 %v783, %v800
        %v802 = vpack.c.bf16 %v801, %v801
        %v804 = vsel %vm505, %v802, 0
        %806 = vmatpush.bf16.msra.mxu0 0
        %807 = vmatpush.bf16.msra.mxu0 0
        %808 = vmatpush.bf16.msra.mxu0 0
        %809 = vmatpush.bf16.msra.mxu0 0
        %810 = vmatpush.bf16.msra.mxu0 0
        %811 = vmatpush.bf16.msra.mxu0 0
        %812 = vmatpush.bf16.msra.mxu0 0
        %813 = vmatpush.bf16.msra.mxu0 %v536
        %814 = vmatmul.bf16.gmra.mxu0 %v804
        %v815 = vpop.f32.mrf.mxu0
        %v816 = vadd.f32 0.0, %v815
        %v817 = vpop.f32.mrf.mxu0
        %818 = vdwg.mxu0
        %820 = vrot.lane.b32.xlu0 %v816, 32
        %v821 = vpop.permute.xlu0 %820
        %v823 = vsel %vm356, %v760, %v821
        %v824 = vpack.c.bf16 %v823, %v823
        %v826 = vsel %vm637, %v824, 0
        %828 = vmatpush.bf16.msra.mxu0 0
        %829 = vmatpush.bf16.msra.mxu0 0
        %830 = vmatpush.bf16.msra.mxu0 0
        %831 = vmatpush.bf16.msra.mxu0 0
        %832 = vmatpush.bf16.msra.mxu0 %v617
        %833 = vmatpush.bf16.msra.mxu0 %v613
        %834 = vmatpush.bf16.msra.mxu0 %v609
        %835 = vmatpush.bf16.msra.mxu0 %v605
        %836 = vmatmul.bf16.gmra.mxu0 %v826
        %v837 = vpop.f32.mrf.mxu0
        %v838 = vadd.f32 0.0, %v837
        %v839 = vpop.f32.mrf.mxu0
        %840 = vdwg.mxu0
        %841 = vmatpush.bf16.msra.mxu0 0
        %842 = vmatpush.bf16.msra.mxu0 0
        %843 = vmatpush.bf16.msra.mxu0 0
        %844 = vmatpush.bf16.msra.mxu0 0
        %845 = vmatpush.bf16.msra.mxu0 %v618
        %846 = vmatpush.bf16.msra.mxu0 %v614
        %847 = vmatpush.bf16.msra.mxu0 %v610
        %848 = vmatpush.bf16.msra.mxu0 %v606
        %849 = vmatmul.bf16.gmra.mxu0 %v826
        %v850 = vpop.f32.mrf.mxu0
        %v851 = vadd.f32 0.0, %v850
        %v852 = vpop.f32.mrf.mxu0
        %853 = vdwg.mxu0
        %854 = vmatpush.bf16.msra.mxu0 0
        %855 = vmatpush.bf16.msra.mxu0 0
        %856 = vmatpush.bf16.msra.mxu0 0
        %857 = vmatpush.bf16.msra.mxu0 0
        %858 = vmatpush.bf16.msra.mxu0 %v619
        %859 = vmatpush.bf16.msra.mxu0 %v615
        %860 = vmatpush.bf16.msra.mxu0 %v611
        %861 = vmatpush.bf16.msra.mxu0 %v607
        %862 = vmatmul.bf16.gmra.mxu0 %v826
        %v863 = vpop.f32.mrf.mxu0
        %v864 = vadd.f32 0.0, %v863
        %v865 = vpop.f32.mrf.mxu0
        %866 = vdwg.mxu0
        %867 = vmatpush.bf16.msra.mxu0 0
        %868 = vmatpush.bf16.msra.mxu0 0
        %869 = vmatpush.bf16.msra.mxu0 0
        %870 = vmatpush.bf16.msra.mxu0 0
        %871 = vmatpush.bf16.msra.mxu0 %v620
        %872 = vmatpush.bf16.msra.mxu0 %v616
        %873 = vmatpush.bf16.msra.mxu0 %v612
        %874 = vmatpush.bf16.msra.mxu0 %v608
        %875 = vmatmul.bf16.gmra.mxu0 %v826
        %v876 = vpop.f32.mrf.mxu0
        %v877 = vadd.f32 0.0, %v876
        %v878 = vpop.f32.mrf.mxu0
        %879 = vdwg.mxu0
        %v880 = vadd.f32 %v370, %v838
        %v881 = vadd.f32 %v383, %v851
        %v882 = vadd.f32 %v396, %v864
        %v883 = vadd.f32 %v409, %v877
        %v884 = vxor.u32 %v880, 2147483648
        %v885 = vmul.f32 %v884, 1.442695
        %v886 = vpow.pop %v885
        %v887 = vadd.f32 %v886, 1.0
        %v888 = vrcp.pop %v887
        %v889 = vmul.f32 %v887, %v888
        %v890 = vsub.f32 1.0, %v889
        %v891 = vmul.f32 %v888, %v890
        %v892 = vadd.f32 %v888, %v891
        %vm893 = vweird.f32 %v887
        %vm894 = vweird.f32 %v888
        %vm895 = vmor %vm893, %vm894
        %v896 = vsel %vm895, %v888, %v892
        %v897 = vand.u32 2147483647, %v887
        %vm898 = vcmp.eq.f32.partialorder %v897, 8.507059e+37
        %v899 = vand.u32 %v887, 2147483648
        %v900 = vor.u32 1.1754944e-38, %v899
        %v901 = vsel %vm898, %v900, %v896
        %v902 = vmul.f32 1.0, %v901
        %v903 = vxor.u32 %v881, 2147483648
        %v904 = vmul.f32 %v903, 1.442695
        %v905 = vpow.pop %v904
        %v906 = vadd.f32 %v905, 1.0
        %v907 = vrcp.pop %v906
        %v908 = vmul.f32 %v906, %v907
        %v909 = vsub.f32 1.0, %v908
        %v910 = vmul.f32 %v907, %v909
        %v911 = vadd.f32 %v907, %v910
        %vm912 = vweird.f32 %v906
        %vm913 = vweird.f32 %v907
        %vm914 = vmor %vm912, %vm913
        %v915 = vsel %vm914, %v907, %v911
        %v916 = vand.u32 2147483647, %v906
        %vm917 = vcmp.eq.f32.partialorder %v916, 8.507059e+37
        %v918 = vand.u32 %v906, 2147483648
        %v919 = vor.u32 1.1754944e-38, %v918
        %v920 = vsel %vm917, %v919, %v915
        %v921 = vmul.f32 1.0, %v920
        %v922 = vtanh.pop %v882
        %v923 = vxor.u32 %v883, 2147483648
        %v924 = vmul.f32 %v923, 1.442695
        %v925 = vpow.pop %v924
        %v926 = vadd.f32 %v925, 1.0
        %v927 = vrcp.pop %v926
        %v928 = vmul.f32 %v926, %v927
        %v929 = vsub.f32 1.0, %v928
        %v930 = vmul.f32 %v927, %v929
        %v931 = vadd.f32 %v927, %v930
        %vm932 = vweird.f32 %v926
        %vm933 = vweird.f32 %v927
        %vm934 = vmor %vm932, %vm933
        %v935 = vsel %vm934, %v927, %v931
        %v936 = vand.u32 2147483647, %v926
        %vm937 = vcmp.eq.f32.partialorder %v936, 8.507059e+37
        %v938 = vand.u32 %v926, 2147483648
        %v939 = vor.u32 1.1754944e-38, %v938
        %v940 = vsel %vm937, %v939, %v935
        %v941 = vmul.f32 1.0, %v940
        %v942 = vmul.f32 %v921, %v757
        %v943 = vmul.f32 %v902, %v922
        %v944 = vadd.f32 %v942, %v943
        %v945 = vtanh.pop %v944
        %v946 = vmul.f32 %v941, %v945
        %v947 = vadd.f32 %v275, %v946
        %v948 = vpack.c.bf16 %v947, %v947
        %v950 = vsel %vm356, %v948, 0
        %952 = vmatpush.bf16.msra.mxu0 0
        %953 = vmatpush.bf16.msra.mxu0 0
        %954 = vmatpush.bf16.msra.mxu0 0
        %955 = vmatpush.bf16.msra.mxu0 0
        %956 = vmatpush.bf16.msra.mxu0 0
        %957 = vmatpush.bf16.msra.mxu0 0
        %958 = vmatpush.bf16.msra.mxu0 %v486
        %959 = vmatpush.bf16.msra.mxu0 %v485
        %960 = vmatmul.bf16.gmra.mxu0 %v950
        %v961 = vpop.f32.mrf.mxu0
        %v962 = vadd.f32 0.0, %v961
        %v963 = vpop.f32.mrf.mxu0
        %964 = vdwg.mxu0
        %v965 = vsel %vm505, %v962, -inf
        %966 = vmax.xlane.f32.xlu0 %v965
        %v967 = vpop.xlane.xlu0 %966
        %v968 = vsub.f32 %v962, %v967
        %v969 = vmul.f32 %v968, 1.442695
        %v970 = vpow.pop %v969
        %v971 = vsel %vm505, %v970, 0.0
        %972 = vadd.xlane.f32.xlu0 %v971
        %v973 = vpop.xlane.xlu0 %972
        %v974 = vrcp.pop %v973
        %v975 = vmul.f32 %v973, %v974
        %v976 = vsub.f32 1.0, %v975
        %v977 = vmul.f32 %v974, %v976
        %v978 = vadd.f32 %v974, %v977
        %vm979 = vweird.f32 %v973
        %vm980 = vweird.f32 %v974
        %vm981 = vmor %vm979, %vm980
        %v982 = vsel %vm981, %v974, %v978
        %v983 = vand.u32 2147483647, %v973
        %vm984 = vcmp.eq.f32.partialorder %v983, 8.507059e+37
        %v985 = vand.u32 %v973, 2147483648
        %v986 = vor.u32 1.1754944e-38, %v985
        %v987 = vsel %vm984, %v986, %v982
        %v988 = vmul.f32 %v970, %v987
        %v989 = vpack.c.bf16 %v988, %v988
        %v991 = vsel %vm505, %v989, 0
        %993 = vmatpush.bf16.msra.mxu0 0
        %994 = vmatpush.bf16.msra.mxu0 0
        %995 = vmatpush.bf16.msra.mxu0 0
        %996 = vmatpush.bf16.msra.mxu0 0
        %997 = vmatpush.bf16.msra.mxu0 0
        %998 = vmatpush.bf16.msra.mxu0 0
        %999 = vmatpush.bf16.msra.mxu0 0
        %1000 = vmatpush.bf16.msra.mxu0 %v536
        %1001 = vmatmul.bf16.gmra.mxu0 %v991
        %v1002 = vpop.f32.mrf.mxu0
        %v1003 = vadd.f32 0.0, %v1002
        %v1004 = vpop.f32.mrf.mxu0
        %1005 = vdwg.mxu0
        %1007 = vrot.lane.b32.xlu0 %v1003, 32
        %v1008 = vpop.permute.xlu0 %1007
        %v1010 = vsel %vm356, %v947, %v1008
        %v1011 = vpack.c.bf16 %v1010, %v1010
        %v1013 = vsel %vm637, %v1011, 0
        %1015 = vmatpush.bf16.msra.mxu0 0
        %1016 = vmatpush.bf16.msra.mxu0 0
        %1017 = vmatpush.bf16.msra.mxu0 0
        %1018 = vmatpush.bf16.msra.mxu0 0
        %1019 = vmatpush.bf16.msra.mxu0 %v617
        %1020 = vmatpush.bf16.msra.mxu0 %v613
        %1021 = vmatpush.bf16.msra.mxu0 %v609
        %1022 = vmatpush.bf16.msra.mxu0 %v605
        %1023 = vmatmul.bf16.gmra.mxu0 %v1013
        %v1024 = vpop.f32.mrf.mxu0
        %v1025 = vadd.f32 0.0, %v1024
        %v1026 = vpop.f32.mrf.mxu0
        %1027 = vdwg.mxu0
        %1028 = vmatpush.bf16.msra.mxu0 0
        %1029 = vmatpush.bf16.msra.mxu0 0
        %1030 = vmatpush.bf16.msra.mxu0 0
        %1031 = vmatpush.bf16.msra.mxu0 0
        %1032 = vmatpush.bf16.msra.mxu0 %v618
        %1033 = vmatpush.bf16.msra.mxu0 %v614
        %1034 = vmatpush.bf16.msra.mxu0 %v610
        %1035 = vmatpush.bf16.msra.mxu0 %v606
        %1036 = vmatmul.bf16.gmra.mxu0 %v1013
        %v1037 = vpop.f32.mrf.mxu0
        %v1038 = vadd.f32 0.0, %v1037
        %v1039 = vpop.f32.mrf.mxu0
        %1040 = vdwg.mxu0
        %1041 = vmatpush.bf16.msra.mxu0 0
        %1042 = vmatpush.bf16.msra.mxu0 0
        %1043 = vmatpush.bf16.msra.mxu0 0
        %1044 = vmatpush.bf16.msra.mxu0 0
        %1045 = vmatpush.bf16.msra.mxu0 %v619
        %1046 = vmatpush.bf16.msra.mxu0 %v615
        %1047 = vmatpush.bf16.msra.mxu0 %v611
        %1048 = vmatpush.bf16.msra.mxu0 %v607
        %1049 = vmatmul.bf16.gmra.mxu0 %v1013
        %v1050 = vpop.f32.mrf.mxu0
        %v1051 = vadd.f32 0.0, %v1050
        %v1052 = vpop.f32.mrf.mxu0
        %1053 = vdwg.mxu0
        %1054 = vmatpush.bf16.msra.mxu0 0
        %1055 = vmatpush.bf16.msra.mxu0 0
        %1056 = vmatpush.bf16.msra.mxu0 0
        %1057 = vmatpush.bf16.msra.mxu0 0
        %1058 = vmatpush.bf16.msra.mxu0 %v620
        %1059 = vmatpush.bf16.msra.mxu0 %v616
        %1060 = vmatpush.bf16.msra.mxu0 %v612
        %1061 = vmatpush.bf16.msra.mxu0 %v608
        %1062 = vmatmul.bf16.gmra.mxu0 %v1013
        %v1063 = vpop.f32.mrf.mxu0
        %v1064 = vadd.f32 0.0, %v1063
        %v1065 = vpop.f32.mrf.mxu0
        %1066 = vdwg.mxu0
        %v1067 = vadd.f32 %v370, %v1025
        %v1068 = vadd.f32 %v383, %v1038
        %v1069 = vadd.f32 %v396, %v1051
        %v1070 = vadd.f32 %v409, %v1064
        %v1071 = vxor.u32 %v1067, 2147483648
        %v1072 = vmul.f32 %v1071, 1.442695
        %v1073 = vpow.pop %v1072
        %v1074 = vadd.f32 %v1073, 1.0
        %v1075 = vrcp.pop %v1074
        %v1076 = vmul.f32 %v1074, %v1075
        %v1077 = vsub.f32 1.0, %v1076
        %v1078 = vmul.f32 %v1075, %v1077
        %v1079 = vadd.f32 %v1075, %v1078
        %vm1080 = vweird.f32 %v1074
        %vm1081 = vweird.f32 %v1075
        %vm1082 = vmor %vm1080, %vm1081
        %v1083 = vsel %vm1082, %v1075, %v1079
        %v1084 = vand.u32 2147483647, %v1074
        %vm1085 = vcmp.eq.f32.partialorder %v1084, 8.507059e+37
        %v1086 = vand.u32 %v1074, 2147483648
        %v1087 = vor.u32 1.1754944e-38, %v1086
        %v1088 = vsel %vm1085, %v1087, %v1083
        %v1089 = vmul.f32 1.0, %v1088
        %v1090 = vxor.u32 %v1068, 2147483648
        %v1091 = vmul.f32 %v1090, 1.442695
        %v1092 = vpow.pop %v1091
        %v1093 = vadd.f32 %v1092, 1.0
        %v1094 = vrcp.pop %v1093
        %v1095 = vmul.f32 %v1093, %v1094
        %v1096 = vsub.f32 1.0, %v1095
        %v1097 = vmul.f32 %v1094, %v1096
        %v1098 = vadd.f32 %v1094, %v1097
        %vm1099 = vweird.f32 %v1093
        %vm1100 = vweird.f32 %v1094
        %vm1101 = vmor %vm1099, %vm1100
        %v1102 = vsel %vm1101, %v1094, %v1098
        %v1103 = vand.u32 2147483647, %v1093
        %vm1104 = vcmp.eq.f32.partialorder %v1103, 8.507059e+37
        %v1105 = vand.u32 %v1093, 2147483648
        %v1106 = vor.u32 1.1754944e-38, %v1105
        %v1107 = vsel %vm1104, %v1106, %v1102
        %v1108 = vmul.f32 1.0, %v1107
        %v1109 = vtanh.pop %v1069
        %v1110 = vxor.u32 %v1070, 2147483648
        %v1111 = vmul.f32 %v1110, 1.442695
        %v1112 = vpow.pop %v1111
        %v1113 = vadd.f32 %v1112, 1.0
        %v1114 = vrcp.pop %v1113
        %v1115 = vmul.f32 %v1113, %v1114
        %v1116 = vsub.f32 1.0, %v1115
        %v1117 = vmul.f32 %v1114, %v1116
        %v1118 = vadd.f32 %v1114, %v1117
        %vm1119 = vweird.f32 %v1113
        %vm1120 = vweird.f32 %v1114
        %vm1121 = vmor %vm1119, %vm1120
        %v1122 = vsel %vm1121, %v1114, %v1118
        %v1123 = vand.u32 2147483647, %v1113
        %vm1124 = vcmp.eq.f32.partialorder %v1123, 8.507059e+37
        %v1125 = vand.u32 %v1113, 2147483648
        %v1126 = vor.u32 1.1754944e-38, %v1125
        %v1127 = vsel %vm1124, %v1126, %v1122
        %v1128 = vmul.f32 1.0, %v1127
        %v1129 = vmul.f32 %v1108, %v944
        %v1130 = vmul.f32 %v1089, %v1109
        %v1131 = vadd.f32 %v1129, %v1130
        %v1132 = vtanh.pop %v1131
        %v1133 = vmul.f32 %v1128, %v1132
        %v1134 = vadd.f32 %v275, %v1133
        %v1135 = vpack.c.bf16 %v1134, %v1134
        %v1137 = vsel %vm356, %v1135, 0
        %1139 = vmatpush.bf16.msra.mxu0 0
        %1140 = vmatpush.bf16.msra.mxu0 0
        %1141 = vmatpush.bf16.msra.mxu0 0
        %1142 = vmatpush.bf16.msra.mxu0 0
        %1143 = vmatpush.bf16.msra.mxu0 0
        %1144 = vmatpush.bf16.msra.mxu0 0
        %1145 = vmatpush.bf16.msra.mxu0 %v486
        %1146 = vmatpush.bf16.msra.mxu0 %v485
        %1147 = vmatmul.bf16.gmra.mxu0 %v1137
        %v1148 = vpop.f32.mrf.mxu0
        %v1149 = vadd.f32 0.0, %v1148
        %v1150 = vpop.f32.mrf.mxu0
        %1151 = vdwg.mxu0
        %1152 = vst.msk [vmem:[%s260] sm:$0xff] %vm505, %v1149
        %s1153 = sand.u32 %s148, 1
        %s1154 = scalar_lea.sflag [#allocation4], %s1153
        %s1155 = sand.u32 %s148, 1
        %s1156 = smul.addr %s1155, 8
        %s1157 = scalar_lea.vmem [#allocation5], %s1156
        // Predicated region
        $region45: #{_matchnet_batched.1} parent=39 // pred_check
          %p1158 = pneg %p158
        $region46: #{_matchnet_batched.1} parent=39 // pred_check_branch
          %1160 = sbr.rel (%p1158) target = $region48
        $region47: #{_matchnet_batched.1} parent=39 // pred_region
          %1162 = vsyncadd %s1154, 0
          %s1163 = smul.addr %s20, 8
          %s1164 = scalar_lea.hbm %s5, %s1163
          %s1166 = sshll.u32 %s1157, 4
          %s1167 = int_to_ptr.vmem [resolvable:$true] %s1166
          %s1168 = sshll.u32 %s1164, 4
          %s1169 = int_to_ptr.hbm [resolvable:$true] %s1168
          %1171 = dma.vmem_to_hbm [thread:$0]  %s1167, 128, %s1169, %s1154
        $region48: #{_matchnet_batched.1} parent=39 // pred_fallthru
          _
      $region40: #{_matchnet_batched.1} parent=5 // pred_fallthru
        _
      %p1172 = scmp.le.s32.totalorder 2, %s15
      // Predicated region
      $region49: #{_matchnet_batched.1} parent=5 // pred_check
        %p1173 = pneg %p1172
      $region50: #{_matchnet_batched.1} parent=5 // pred_check_branch
        %1175 = sbr.rel (%p1173) target = $region52
      $region51: #{_matchnet_batched.1} parent=5 // pred_region
        %s1176 = ssub.s32 %s15, 2
        // Predicated region
        $region53: #{_matchnet_batched.1} parent=51 // pred_check
          %p1177 = pneg %p164
        $region54: #{_matchnet_batched.1} parent=51 // pred_check_branch
          %1179 = sbr.rel (%p1177) target = $region56
        $region55: #{_matchnet_batched.1} parent=51 // pred_region
          %s1180 = sand.u32 %s149, 1
          %s1181 = scalar_lea.sflag [#allocation4], %s1180
          %s1182 = sand.u32 %s149, 1
          %s1183 = smul.addr %s1182, 8
          %s1184 = scalar_lea.vmem [#allocation5], %s1183
          %1186 = dma.done %s1181, 128
        $region56: #{_matchnet_batched.1} parent=51 // pred_fallthru
          _
      $region52: #{_matchnet_batched.1} parent=5 // pred_fallthru
        _
    $region6: #{_matchnet_batched.1} parent=1 // loop_footer
      %s19 = sadd.s32 1, %s15
    $region7: #{_matchnet_batched.1} parent=1 // loop_footer_branch
      %14 = sbr.rel target = $region3
    $region8: #{_matchnet_batched.1} parent=1 // loop_exit
      _
    %1187 = vsyncpa [#allocation3], 1
    %s1188 = scalar_lea.sflag [#allocation3], 1
    %1189 = vsyncpa %s1188, 1
    %1190 = vsyncpa [#allocation4], 1
    %s1191 = scalar_lea.sflag [#allocation4], 1
    %1192 = vsyncpa %s1191, 1

</llo_original>
